<compile_context>
chip_gen: v5e
topology: v5e:2x2
jax: 0.10.0
libtpu: 0.0.40
codegen_flags: <defaults>
</compile_context>

<pallas_src>
import functools

import numpy as np
import jax
import jax.numpy as jnp
from jax import lax
from jax.experimental import pallas as pl
from jax.experimental.pallas import tpu as pltpu


def _round_up(x, m):
    return ((x + m - 1) // m) * m


def _bilinear_matrix(n_in, n_out):
    """A (n_out, n_in) such that out = A @ in == bilinear, align_corners=True."""
    A = np.zeros((n_out, n_in), dtype=np.float32)
    if n_out == 1 or n_in == 1:
        A[:, 0] = 1.0
        return A
    scale = (n_in - 1) / (n_out - 1)
    for i in range(n_out):
        src = i * scale
        i0 = min(int(np.floor(src)), n_in - 1)
        i1 = min(i0 + 1, n_in - 1)
        w1 = src - i0
        A[i, i0] += 1.0 - w1
        A[i, i1] += w1
    return A


def _tpu_vmem_capacity():
    """Physical VMEM bytes (128 MiB fallback if the query is unavailable)."""
    try:
        info = pltpu.get_tpu_info()
        cap = getattr(info, "vmem_capacity_bytes", None)
        if cap:
            return int(cap)
    except Exception:
        pass
    return 128 << 20


def _pick_row_tile(H, th_max):
    """Row tile (multiple of 32, <= th_max) trading per-step overhead vs. padded rows."""
    cap = max(32, min(th_max, _round_up(H, 32)))
    cap -= cap % 32
    best_th, best_cost = 32, None
    for th in range(32, cap + 1, 32):
        n = -(-H // th)
        cost = 24 * n + (n * th - H)   # ~per-step overhead (in rows) + padded-row waste
        if best_cost is None or cost < best_cost or (cost == best_cost and th > best_th):
            best_th, best_cost = th, cost
    return best_th


def _eval_monodepth_kernel(width_scale, full_h,          # python constants (partial)
                           k_ref,                        # (B,) f32 scalar prefetch (SMEM)
                           row_ref, ah_ref, gt_ref, mask_ref,
                           out_disp_ref, out_depth_ref,
                           abs_ref, sq_ref, cnt_ref):
    b = pl.program_id(0)
    t = pl.program_id(1)
    th = ah_ref.shape[0]

    # --- height interpolation for this row tile (MXU, bf16 in, f32 accumulate) ---
    #     up = A_H[tile] @ row : (TH, h) @ (h, W) -> (TH, W)
    up = jnp.dot(ah_ref[...], row_ref[0], preferred_element_type=jnp.float32)
    out_disp = up * jnp.float32(width_scale)             # * gt_disp.size(3)

    # --- disp -> depth (KITTI): K[0,0]*0.54 / (disp + (1 - (disp>0))), clamp ---
    #     EUP reciprocal + one Newton step ~ f32-exact; exact PyTorch denominator
    #     is kept (for disp <= 0 it is disp + 1, not 1; the clamp hides it).
    pos = (out_disp > 0.0).astype(jnp.float32)
    denom = out_disp + (1.0 - pos)
    r = pl.reciprocal(denom, approx=True)
    r = r * (2.0 - denom * r)                            # Newton refinement
    kv = k_ref[b] * jnp.float32(0.54)
    depth = jnp.clip(kv * r, 0.001, 80.0)

    out_disp_ref[0, 0] = out_disp.astype(out_disp_ref.dtype)
    out_depth_ref[0, 0] = depth.astype(out_depth_ref.dtype)

    # --- masked abs_rel / sq_rel partial sums (compute_errors on disparities) ---
    gt = gt_ref[0, 0].astype(jnp.float32)                # (TH, W)
    rows = lax.broadcasted_iota(jnp.int32, gt.shape, 0) + t * th
    valid = jnp.logical_and(mask_ref[0, 0] == 1, rows < full_h)   # OOB tile rows excluded
    valid_f = valid.astype(jnp.float32)
    gt = jnp.where(valid, gt, 0.0)                       # sanitize stale/OOB lanes
    gt_safe = gt + (1.0 - valid_f)                       # 1.0 where invalid
    inv = pl.reciprocal(gt_safe, approx=True)
    inv = inv * (2.0 - gt_safe * inv)                    # Newton -> ~exact 1/gt
    inv_gt = inv * valid_f                               # 0 at invalid: no more selects
    adiff = jnp.abs(gt - out_disp)
    rel = adiff * inv_gt                                 # |gt - pred| / gt  (0 invalid)
    abs_sum = jnp.sum(rel)
    sq_sum = jnp.sum(rel * adiff)                        # (gt - pred)^2 / gt
    cnt = jnp.sum(valid_f)

    ones = jnp.ones((1, 128), jnp.float32)               # tiny lane-dense scalar slabs
    abs_ref[0, 0] = abs_sum * ones
    sq_ref[0, 0] = sq_sum * ones
    cnt_ref[0, 0] = cnt * ones

    # TODO(synk): 'otl', rms/log_rms/a1/a2/a3, gt_depth_pp and the logging calls are
    # computed inside the PyTorch module but never returned by forward(); omitted.


def eval_monodepth(disp_l1_pp, target_disp, target_disp_mask, intrinsics,
                   *, out_dtype=jnp.bfloat16, row_tile=None):
    """Eval_MonoDepth.forward.

    Returns (loss_dict{'ab_r','sq_r'}, out_disp_l_pp, out_depth_l_pp) with the
    full-res outputs at the true (H, W) in `out_dtype` (default bfloat16).
    """
    B, _, h, w = disp_l1_pp.shape
    _, _, H, W = target_disp.shape

    if row_tile is None:
        row_tile = 128 if _tpu_vmem_capacity() <= (64 << 20) else 256
    TH = _pick_row_tile(H, row_tile)
    n_ht = -(-H // TH)

    # Separable bilinear (align_corners=True) weight matrices; bf16 for the MXU.
    ah_np = np.zeros((n_ht * TH, h), np.float32)
    ah_np[:H] = _bilinear_matrix(h, H)                   # padded rows are exact zeros
    ah = jnp.asarray(ah_np, dtype=jnp.bfloat16)          # (Hp, h)
    aw = jnp.asarray(_bilinear_matrix(w, W))             # (W, w) f32

    # Width interpolation hoisted to a tiny XLA matmul (B*h*w*W MACs, KB-scale
    # output). Removes the per-b scratch carry so both grid axes run in parallel.
    row = jnp.einsum("bhw,xw->bhx", disp_l1_pp[:, 0].astype(jnp.float32), aw)
    row = row.astype(jnp.bfloat16)                       # (B, h, W)

    k_vec = intrinsics[:, 0, 0].astype(jnp.float32)      # (B,) scalar prefetch

    kernel = functools.partial(_eval_monodepth_kernel, float(W), H)

    out_shapes = (
        jax.ShapeDtypeStruct((B, 1, H, W), out_dtype),           # out_disp_l_pp
        jax.ShapeDtypeStruct((B, 1, H, W), out_dtype),           # out_depth_l_pp
        jax.ShapeDtypeStruct((B, n_ht, 1, 128), jnp.float32),    # abs_rel partials
        jax.ShapeDtypeStruct((B, n_ht, 1, 128), jnp.float32),    # sq_rel partials
        jax.ShapeDtypeStruct((B, n_ht, 1, 128), jnp.float32),    # valid-count partials
    )

    grid_spec = pltpu.PrefetchScalarGridSpec(
        num_scalar_prefetch=1,
        grid=(B, n_ht),
        in_specs=[
            pl.BlockSpec((1, h, W), lambda b, t, k: (b, 0, 0)),         # width-interp rows
            pl.BlockSpec((TH, h), lambda b, t, k: (t, 0)),              # A_H row tile
            pl.BlockSpec((1, 1, TH, W), lambda b, t, k: (b, 0, t, 0)),  # gt disparity
            pl.BlockSpec((1, 1, TH, W), lambda b, t, k: (b, 0, t, 0)),  # validity mask
        ],
        out_specs=[
            pl.BlockSpec((1, 1, TH, W), lambda b, t, k: (b, 0, t, 0)),
            pl.BlockSpec((1, 1, TH, W), lambda b, t, k: (b, 0, t, 0)),
            pl.BlockSpec((1, 1, 1, 128), lambda b, t, k: (b, t, 0, 0)),
            pl.BlockSpec((1, 1, 1, 128), lambda b, t, k: (b, t, 0, 0)),
            pl.BlockSpec((1, 1, 1, 128), lambda b, t, k: (b, t, 0, 0)),
        ],
    )

    # VMEM budget: double-buffered tiles + live f32 temporaries, with headroom,
    # capped at half the physical VMEM (never request the whole chip on v7x).
    blk = TH * W
    est = (2 * (blk * (target_disp.dtype.itemsize + target_disp_mask.dtype.itemsize
                       + 2 * jnp.dtype(out_dtype).itemsize)
                + h * W * 2 + TH * h * 2 + 3 * 128 * 4)
           + 8 * blk * 4)
    vmem_limit = int(min(max(2 * est, 16 << 20), max(_tpu_vmem_capacity() // 2, 32 << 20)))

    out_disp, out_depth, abs_p, sq_p, cnt_p = pl.pallas_call(
        kernel,
        out_shape=out_shapes,
        grid_spec=grid_spec,
        compiler_params=pltpu.CompilerParams(
            dimension_semantics=("parallel", "parallel"),
            vmem_limit_bytes=vmem_limit),
    )(k_vec, row, ah, target_disp, target_disp_mask)

    # compute_errors flattens gt_disp[mask] across the whole batch -> single mean.
    total = jnp.sum(cnt_p[:, :, 0, 0])
    loss_dict = {
        "ab_r": jnp.sum(abs_p[:, :, 0, 0]) / total,
        "sq_r": jnp.sum(sq_p[:, :, 0, 0]) / total,
    }
    return loss_dict, out_disp, out_depth


def _reference(disp_l1_pp, target_disp, target_disp_mask, intrinsics):
    """Plain-JAX (f32) reference of the same math, for a sanity check."""
    B, _, h, w = disp_l1_pp.shape
    _, _, H, W = target_disp.shape
    ah = jnp.asarray(_bilinear_matrix(h, H))
    aw = jnp.asarray(_bilinear_matrix(w, W))
    up = jnp.einsum("Hh,bchw,xw->bcHx", ah, disp_l1_pp, aw) * W
    k = intrinsics[:, 0, 0].reshape(B, 1, 1, 1)
    pos = (up > 0).astype(jnp.float32)
    depth = jnp.clip(k * 0.54 / (up + (1.0 - pos)), 0.001, 80.0)
    valid = target_disp_mask == 1.0
    gt_safe = jnp.where(valid, target_disp, 1.0)
    diff = target_disp - up
    n = jnp.sum(valid)
    ab_r = jnp.sum(jnp.where(valid, jnp.abs(diff) / gt_safe, 0.0)) / n
    sq_r = jnp.sum(jnp.where(valid, diff * diff / gt_safe, 0.0)) / n
    return ab_r, sq_r, up, depth


if __name__ == "__main__":
    # Small shapes: W=200 exercises the unpadded full-W (partial-vreg store) path,
    # H=100 with row_tile=64 exercises a partial last row tile (rows 64..99 valid).
    B, h, w, H, W = 2, 8, 64, 100, 200
    key = jax.random.PRNGKey(0)
    k1, k2, k3, k4 = jax.random.split(key, 4)

    disp_l1_pp = jax.random.uniform(k1, (B, 1, h, w), jnp.float32, 0.01, 0.3)
    target_disp = jax.random.uniform(k2, (B, 1, H, W), jnp.float32, 1.0, 50.0)
    target_disp_mask = (jax.random.uniform(k3, (B, 1, H, W)) > 0.3).astype(jnp.float32)
    focal = jax.random.uniform(k4, (B,), jnp.float32, 600.0, 800.0)
    intr = jnp.zeros((B, 3, 3), jnp.float32)
    intr = intr.at[:, 0, 0].set(focal).at[:, 1, 1].set(focal)
    intr = intr.at[:, 0, 2].set(W / 2.0).at[:, 1, 2].set(H / 2.0).at[:, 2, 2].set(1.0)

    loss_dict, out_disp, out_depth = eval_monodepth(
        disp_l1_pp, target_disp, target_disp_mask, intr, row_tile=64)
    jax.block_until_ready((loss_dict, out_disp, out_depth))

    ab_ref, sq_ref_v, disp_ref, depth_ref = _reference(
        disp_l1_pp, target_disp, target_disp_mask, intr)

    # Outputs are bf16 and the upsample matmuls use bf16 operands (f32 accumulate),
    # so tolerances account for ~1% bf16 rounding; losses use f32 + Newton recip.
    np.testing.assert_allclose(np.asarray(out_disp, dtype=np.float32),
                               np.asarray(disp_ref), rtol=3e-2, atol=5e-2)
    np.testing.assert_allclose(np.asarray(out_depth, dtype=np.float32),
                               np.asarray(depth_ref), rtol=3e-2, atol=5e-2)
    np.testing.assert_allclose(float(loss_dict["ab_r"]), float(ab_ref),
                               rtol=3e-2, atol=1e-3)
    np.testing.assert_allclose(float(loss_dict["sq_r"]), float(sq_ref_v),
                               rtol=3e-2, atol=1e-3)

    print("KERNEL_OK")
</pallas_src>

<mosaic_0001>
module attributes {stable_mosaic.version = 11 : i64} {
  func.func @_eval_monodepth_kernel(%arg0: i32, %arg1: i32, %arg2: memref<2xf32, #tpu.memory_space<smem>>, %arg3: memref<1x8x200xbf16, #tpu.memory_space<vmem>>, %arg4: memref<64x8xbf16, #tpu.memory_space<vmem>>, %arg5: memref<1x1x64x200xf32, #tpu.memory_space<vmem>>, %arg6: memref<1x1x64x200xf32, #tpu.memory_space<vmem>>, %arg7: memref<1x1x64x200xbf16, #tpu.memory_space<vmem>>, %arg8: memref<1x1x64x200xbf16, #tpu.memory_space<vmem>>, %arg9: memref<1x1x1x128xf32, #tpu.memory_space<vmem>>, %arg10: memref<1x1x1x128xf32, #tpu.memory_space<vmem>>, %arg11: memref<1x1x1x128xf32, #tpu.memory_space<vmem>>) attributes {dimension_semantics = [#tpu.dimension_semantics<parallel>, #tpu.dimension_semantics<parallel>], iteration_bounds = array<i64: 2, 2>, scalar_prefetch = 1 : i64, scratch_operands = 0 : i64, tpu.core_type = #tpu.core_type<tc>, window_params = [{transform_indices = @transform_0, window_bounds = array<i64: 1, 8, 200>}, {transform_indices = @transform_1, window_bounds = array<i64: 64, 8>}, {transform_indices = @transform_2, window_bounds = array<i64: 1, 1, 64, 200>}, {transform_indices = @transform_3, window_bounds = array<i64: 1, 1, 64, 200>}, {transform_indices = @transform_4, window_bounds = array<i64: 1, 1, 64, 200>}, {transform_indices = @transform_5, window_bounds = array<i64: 1, 1, 64, 200>}, {transform_indices = @transform_6, window_bounds = array<i64: 1, 1, 1, 128>}, {transform_indices = @transform_7, window_bounds = array<i64: 1, 1, 1, 128>}, {transform_indices = @transform_8, window_bounds = array<i64: 1, 1, 1, 128>}]} {
    %c0 = arith.constant 0 : index
    %c0_0 = arith.constant 0 : index
    %0 = vector.load %arg4[%c0, %c0_0] : memref<64x8xbf16, #tpu.memory_space<vmem>>, vector<64x8xbf16>
    %c0_1 = arith.constant 0 : index
    %c0_2 = arith.constant 0 : index
    %c0_3 = arith.constant 0 : index
    %1 = vector.load %arg3[%c0_1, %c0_2, %c0_3] : memref<1x8x200xbf16, #tpu.memory_space<vmem>>, vector<1x8x200xbf16>
    %2 = vector.shape_cast %1 : vector<1x8x200xbf16> to vector<8x200xbf16>
    %cst = arith.constant dense<0.000000e+00> : vector<64x200xf32>
    %3 = tpu.matmul %0, %2, %cst {dimension_numbers = #tpu.dot_dimension_numbers<[1], [0], [0], [1], [0, 0, 1, 1], [], []>} : vector<64x8xbf16>, vector<8x200xbf16>, vector<64x200xf32> -> vector<64x200xf32>
    %cst_4 = arith.constant 2.000000e+02 : f32
    %4 = vector.broadcast %cst_4 : f32 to vector<64x200xf32>
    %5 = arith.mulf %3, %4 : vector<64x200xf32>
    %cst_5 = arith.constant 0.000000e+00 : f32
    %6 = vector.broadcast %cst_5 : f32 to vector<64x200xf32>
    %7 = arith.cmpf ogt, %5, %6 : vector<64x200xf32>
    %8 = arith.extui %7 : vector<64x200xi1> to vector<64x200xi32>
    %9 = arith.sitofp %8 : vector<64x200xi32> to vector<64x200xf32>
    %cst_6 = arith.constant 1.000000e+00 : f32
    %10 = vector.broadcast %cst_6 : f32 to vector<64x200xf32>
    %11 = arith.subf %10, %9 : vector<64x200xf32>
    %12 = arith.addf %5, %11 : vector<64x200xf32>
    %13 = tpu.reciprocal %12 {approx = true} : vector<64x200xf32> -> vector<64x200xf32>
    %14 = arith.mulf %12, %13 : vector<64x200xf32>
    %cst_7 = arith.constant 2.000000e+00 : f32
    %15 = vector.broadcast %cst_7 : f32 to vector<64x200xf32>
    %16 = arith.subf %15, %14 : vector<64x200xf32>
    %17 = arith.mulf %13, %16 : vector<64x200xf32>
    %18 = arith.index_cast %arg0 : i32 to index
    %19 = memref.load %arg2[%18] : memref<2xf32, #tpu.memory_space<smem>>
    %cst_8 = arith.constant 5.400000e-01 : f32
    %20 = arith.mulf %19, %cst_8 : f32
    %21 = vector.broadcast %20 : f32 to vector<64x200xf32>
    %22 = arith.mulf %21, %17 : vector<64x200xf32>
    %cst_9 = arith.constant 1.000000e-03 : f32
    %cst_10 = arith.constant 8.000000e+01 : f32
    %23 = vector.broadcast %cst_9 : f32 to vector<64x200xf32>
    %24 = arith.maximumf %23, %22 : vector<64x200xf32>
    %25 = vector.broadcast %cst_10 : f32 to vector<64x200xf32>
    %26 = arith.minimumf %25, %24 : vector<64x200xf32>
    %27 = arith.truncf %5 : vector<64x200xf32> to vector<64x200xbf16>
    %c0_11 = arith.constant 0 : index
    %c0_12 = arith.constant 0 : index
    %c0_13 = arith.constant 0 : index
    %c0_14 = arith.constant 0 : index
    %28 = vector.load %arg7[%c0_11, %c0_12, %c0_13, %c0_14] : memref<1x1x64x200xbf16, #tpu.memory_space<vmem>>, vector<1x1x64x200xbf16>
    %29 = vector.shape_cast %28 : vector<1x1x64x200xbf16> to vector<64x200xbf16>
    %30 = vector.shape_cast %27 : vector<64x200xbf16> to vector<1x1x64x200xbf16>
    tpu.vector_store %arg7[%c0_11, %c0_12, %c0_13, %c0_14], %30 {strides = array<i32>} : memref<1x1x64x200xbf16, #tpu.memory_space<vmem>>, vector<1x1x64x200xbf16>,
    %31 = arith.truncf %26 : vector<64x200xf32> to vector<64x200xbf16>
    %c0_15 = arith.constant 0 : index
    %c0_16 = arith.constant 0 : index
    %c0_17 = arith.constant 0 : index
    %c0_18 = arith.constant 0 : index
    %32 = vector.load %arg8[%c0_15, %c0_16, %c0_17, %c0_18] : memref<1x1x64x200xbf16, #tpu.memory_space<vmem>>, vector<1x1x64x200xbf16>
    %33 = vector.shape_cast %32 : vector<1x1x64x200xbf16> to vector<64x200xbf16>
    %34 = vector.shape_cast %31 : vector<64x200xbf16> to vector<1x1x64x200xbf16>
    tpu.vector_store %arg8[%c0_15, %c0_16, %c0_17, %c0_18], %34 {strides = array<i32>} : memref<1x1x64x200xbf16, #tpu.memory_space<vmem>>, vector<1x1x64x200xbf16>,
    %c0_19 = arith.constant 0 : index
    %c0_20 = arith.constant 0 : index
    %c0_21 = arith.constant 0 : index
    %c0_22 = arith.constant 0 : index
    %35 = vector.load %arg5[%c0_19, %c0_20, %c0_21, %c0_22] : memref<1x1x64x200xf32, #tpu.memory_space<vmem>>, vector<1x1x64x200xf32>
    %36 = vector.shape_cast %35 : vector<1x1x64x200xf32> to vector<64x200xf32>
    %37 = tpu.iota {dimensions = array<i32: 0>} : vector<64x200xi32>
    %c64_i32 = arith.constant 64 : i32
    %38 = arith.muli %arg1, %c64_i32 : i32
    %39 = vector.broadcast %38 : i32 to vector<64x200xi32>
    %40 = arith.addi %37, %39 : vector<64x200xi32>
    %c0_23 = arith.constant 0 : index
    %c0_24 = arith.constant 0 : index
    %c0_25 = arith.constant 0 : index
    %c0_26 = arith.constant 0 : index
    %41 = vector.load %arg6[%c0_23, %c0_24, %c0_25, %c0_26] : memref<1x1x64x200xf32, #tpu.memory_space<vmem>>, vector<1x1x64x200xf32>
    %42 = vector.shape_cast %41 : vector<1x1x64x200xf32> to vector<64x200xf32>
    %cst_27 = arith.constant 1.000000e+00 : f32
    %43 = vector.broadcast %cst_27 : f32 to vector<64x200xf32>
    %44 = arith.cmpf oeq, %42, %43 : vector<64x200xf32>
    %c100_i32 = arith.constant 100 : i32
    %45 = vector.broadcast %c100_i32 : i32 to vector<64x200xi32>
    %46 = arith.cmpi slt, %40, %45 : vector<64x200xi32>
    %47 = arith.andi %44, %46 : vector<64x200xi1>
    %48 = arith.extui %47 : vector<64x200xi1> to vector<64x200xi32>
    %49 = arith.sitofp %48 : vector<64x200xi32> to vector<64x200xf32>
    %cst_28 = arith.constant 0.000000e+00 : f32
    %50 = vector.broadcast %cst_28 : f32 to vector<64x200xf32>
    %51 = arith.select %47, %36, %50 : vector<64x200xi1>, vector<64x200xf32>
    %cst_29 = arith.constant 1.000000e+00 : f32
    %52 = vector.broadcast %cst_29 : f32 to vector<64x200xf32>
    %53 = arith.subf %52, %49 : vector<64x200xf32>
    %54 = arith.addf %51, %53 : vector<64x200xf32>
    %55 = tpu.reciprocal %54 {approx = true} : vector<64x200xf32> -> vector<64x200xf32>
    %56 = arith.mulf %54, %55 : vector<64x200xf32>
    %cst_30 = arith.constant 2.000000e+00 : f32
    %57 = vector.broadcast %cst_30 : f32 to vector<64x200xf32>
    %58 = arith.subf %57, %56 : vector<64x200xf32>
    %59 = arith.mulf %55, %58 : vector<64x200xf32>
    %60 = arith.mulf %59, %49 : vector<64x200xf32>
    %61 = arith.subf %51, %5 : vector<64x200xf32>
    %62 = math.absf %61 : vector<64x200xf32>
    %63 = arith.mulf %62, %60 : vector<64x200xf32>
    %64 = vector.shape_cast %63 : vector<64x200xf32> to vector<1x64x200xf32>
    %cst_31 = arith.constant dense<0.000000e+00> : vector<1xf32>
    %65 = vector.multi_reduction <add>, %64, %cst_31 [1, 2] : vector<1x64x200xf32> to vector<1xf32>
    %66 = vector.shape_cast %65 : vector<1xf32> to vector<1x1x1xf32>
    %67 = vector.extract %66[0, 0, 0] : f32 from vector<1x1x1xf32>
    %68 = arith.mulf %63, %62 : vector<64x200xf32>
    %69 = vector.shape_cast %68 : vector<64x200xf32> to vector<1x64x200xf32>
    %cst_32 = arith.constant dense<0.000000e+00> : vector<1xf32>
    %70 = vector.multi_reduction <add>, %69, %cst_32 [1, 2] : vector<1x64x200xf32> to vector<1xf32>
    %71 = vector.shape_cast %70 : vector<1xf32> to vector<1x1x1xf32>
    %72 = vector.extract %71[0, 0, 0] : f32 from vector<1x1x1xf32>
    %73 = vector.shape_cast %49 : vector<64x200xf32> to vector<1x64x200xf32>
    %cst_33 = arith.constant dense<0.000000e+00> : vector<1xf32>
    %74 = vector.multi_reduction <add>, %73, %cst_33 [1, 2] : vector<1x64x200xf32> to vector<1xf32>
    %75 = vector.shape_cast %74 : vector<1xf32> to vector<1x1x1xf32>
    %76 = vector.extract %75[0, 0, 0] : f32 from vector<1x1x1xf32>
    %cst_34 = arith.constant 1.000000e+00 : f32
    %77 = vector.broadcast %cst_34 : f32 to vector<1x128xf32>
    %78 = vector.broadcast %67 : f32 to vector<1x128xf32>
    %79 = arith.mulf %78, %77 : vector<1x128xf32>
    %c0_35 = arith.constant 0 : index
    %c0_36 = arith.constant 0 : index
    %c0_37 = arith.constant 0 : index
    %c0_38 = arith.constant 0 : index
    %80 = vector.load %arg9[%c0_35, %c0_36, %c0_37, %c0_38] : memref<1x1x1x128xf32, #tpu.memory_space<vmem>>, vector<1x1x1x128xf32>
    %81 = vector.shape_cast %80 : vector<1x1x1x128xf32> to vector<1x128xf32>
    %82 = vector.shape_cast %79 : vector<1x128xf32> to vector<1x1x1x128xf32>
    tpu.vector_store %arg9[%c0_35, %c0_36, %c0_37, %c0_38], %82 {strides = array<i32>} : memref<1x1x1x128xf32, #tpu.memory_space<vmem>>, vector<1x1x1x128xf32>,
    %83 = vector.broadcast %72 : f32 to vector<1x128xf32>
    %84 = arith.mulf %83, %77 : vector<1x128xf32>
    %c0_39 = arith.constant 0 : index
    %c0_40 = arith.constant 0 : index
    %c0_41 = arith.constant 0 : index
    %c0_42 = arith.constant 0 : index
    %85 = vector.load %arg10[%c0_39, %c0_40, %c0_41, %c0_42] : memref<1x1x1x128xf32, #tpu.memory_space<vmem>>, vector<1x1x1x128xf32>
    %86 = vector.shape_cast %85 : vector<1x1x1x128xf32> to vector<1x128xf32>
    %87 = vector.shape_cast %84 : vector<1x128xf32> to vector<1x1x1x128xf32>
    tpu.vector_store %arg10[%c0_39, %c0_40, %c0_41, %c0_42], %87 {strides = array<i32>} : memref<1x1x1x128xf32, #tpu.memory_space<vmem>>, vector<1x1x1x128xf32>,
    %88 = vector.broadcast %76 : f32 to vector<1x128xf32>
    %89 = arith.mulf %88, %77 : vector<1x128xf32>
    %c0_43 = arith.constant 0 : index
    %c0_44 = arith.constant 0 : index
    %c0_45 = arith.constant 0 : index
    %c0_46 = arith.constant 0 : index
    %90 = vector.load %arg11[%c0_43, %c0_44, %c0_45, %c0_46] : memref<1x1x1x128xf32, #tpu.memory_space<vmem>>, vector<1x1x1x128xf32>
    %91 = vector.shape_cast %90 : vector<1x1x1x128xf32> to vector<1x128xf32>
    %92 = vector.shape_cast %89 : vector<1x128xf32> to vector<1x1x1x128xf32>
    tpu.vector_store %arg11[%c0_43, %c0_44, %c0_45, %c0_46], %92 {strides = array<i32>} : memref<1x1x1x128xf32, #tpu.memory_space<vmem>>, vector<1x1x1x128xf32>,
    return
  }
  func.func @transform_0(%arg0: i32, %arg1: i32, %arg2: memref<2xf32, #tpu.memory_space<smem>>) -> (i32, i32, i32) {
    %c0_i32 = arith.constant 0 : i32
    %c0_i32_0 = arith.constant 0 : i32
    %c0_i32_1 = arith.constant 0 : i32
    return %arg0, %c0_i32, %c0_i32_0 : i32, i32, i32
  }
  func.func @transform_1(%arg0: i32, %arg1: i32, %arg2: memref<2xf32, #tpu.memory_space<smem>>) -> (i32, i32) {
    %c0_i32 = arith.constant 0 : i32
    %c0_i32_0 = arith.constant 0 : i32
    return %arg1, %c0_i32 : i32, i32
  }
  func.func @transform_2(%arg0: i32, %arg1: i32, %arg2: memref<2xf32, #tpu.memory_space<smem>>) -> (i32, i32, i32, i32) {
    %c0_i32 = arith.constant 0 : i32
    %c0_i32_0 = arith.constant 0 : i32
    %c0_i32_1 = arith.constant 0 : i32
    return %arg0, %c0_i32, %arg1, %c0_i32_0 : i32, i32, i32, i32
  }
  func.func @transform_3(%arg0: i32, %arg1: i32, %arg2: memref<2xf32, #tpu.memory_space<smem>>) -> (i32, i32, i32, i32) {
    %c0_i32 = arith.constant 0 : i32
    %c0_i32_0 = arith.constant 0 : i32
    %c0_i32_1 = arith.constant 0 : i32
    return %arg0, %c0_i32, %arg1, %c0_i32_0 : i32, i32, i32, i32
  }
  func.func @transform_4(%arg0: i32, %arg1: i32, %arg2: memref<2xf32, #tpu.memory_space<smem>>) -> (i32, i32, i32, i32) {
    %c0_i32 = arith.constant 0 : i32
    %c0_i32_0 = arith.constant 0 : i32
    %c0_i32_1 = arith.constant 0 : i32
    return %arg0, %c0_i32, %arg1, %c0_i32_0 : i32, i32, i32, i32
  }
  func.func @transform_5(%arg0: i32, %arg1: i32, %arg2: memref<2xf32, #tpu.memory_space<smem>>) -> (i32, i32, i32, i32) {
    %c0_i32 = arith.constant 0 : i32
    %c0_i32_0 = arith.constant 0 : i32
    %c0_i32_1 = arith.constant 0 : i32
    return %arg0, %c0_i32, %arg1, %c0_i32_0 : i32, i32, i32, i32
  }
  func.func @transform_6(%arg0: i32, %arg1: i32, %arg2: memref<2xf32, #tpu.memory_space<smem>>) -> (i32, i32, i32, i32) {
    %c0_i32 = arith.constant 0 : i32
    %c0_i32_0 = arith.constant 0 : i32
    %c0_i32_1 = arith.constant 0 : i32
    return %arg0, %arg1, %c0_i32, %c0_i32_0 : i32, i32, i32, i32
  }
  func.func @transform_7(%arg0: i32, %arg1: i32, %arg2: memref<2xf32, #tpu.memory_space<smem>>) -> (i32, i32, i32, i32) {
    %c0_i32 = arith.constant 0 : i32
    %c0_i32_0 = arith.constant 0 : i32
    %c0_i32_1 = arith.constant 0 : i32
    return %arg0, %arg1, %c0_i32, %c0_i32_0 : i32, i32, i32, i32
  }
  func.func @transform_8(%arg0: i32, %arg1: i32, %arg2: memref<2xf32, #tpu.memory_space<smem>>) -> (i32, i32, i32, i32) {
    %c0_i32 = arith.constant 0 : i32
    %c0_i32_0 = arith.constant 0 : i32
    %c0_i32_1 = arith.constant 0 : i32
    return %arg0, %arg1, %c0_i32, %c0_i32_0 : i32, i32, i32, i32
  }
}

</mosaic_0001>

<llo_original>
// kernel: tpu_custom_call.1
$region0: #{tpu_custom_call.1}
  #allocation0 [shape = 'u32[]', space=smem, size = 0x4, offset = 0x4, fixed_abs, tag = 'smem constant byte address 0x4 - core index']
  #allocation1 [shape = 'u32[72,128]{1,0:T(1,128)}', space=vmem, size = 0x9000, scoped, tag = 'internal scratch']
  #allocation2 [shape = 's32[1]{0}', space=sflag, size = 0x4, scoped, tag = 'scoped memory for tpu_custom_call.1']
  #allocation3 [shape = 'u8[512]{0}', space=smem, size = 0x200, scoped, tag = 'prefetched SMEM operand 0']
  %s0 = inlined_call_operand.vmem [shape: f32[2], index: 0, kind: input, shape index: {}]
  %s1 = inlined_call_operand.vmem [shape: bf16[2,8,200], index: 1, kind: input, shape index: {}]
  %s2 = inlined_call_operand.vmem [shape: bf16[128,8], index: 2, kind: input, shape index: {}]
  %s3 = inlined_call_operand.vmem [shape: f32[2,1,100,200], index: 3, kind: input, shape index: {}]
  %s4 = inlined_call_operand.vmem [shape: f32[2,1,100,200], index: 4, kind: input, shape index: {}]
  %s5 = inlined_call_operand.vmem [shape: bf16[2,1,100,200], index: 5, kind: output, shape index: {0}]
  %s6 = inlined_call_operand.vmem [shape: bf16[2,1,100,200], index: 6, kind: output, shape index: {1}]
  %s7 = inlined_call_operand.hbm [shape: f32[2,2,1,128], index: 7, kind: output, shape index: {2}]
  %s8 = inlined_call_operand.hbm [shape: f32[2,2,1,128], index: 8, kind: output, shape index: {3}]
  %s9 = inlined_call_operand.hbm [shape: f32[2,2,1,128], index: 9, kind: output, shape index: {4}]
  %10 = xla_tuple %s5, %s6, %s7, %s8, %s9
  %s11 = sld [smem:[#allocation0]]
  $region177: #{tpu_custom_call.1} parent=0
    _
  %s13 = ssub.s32 1, %s11
  %s14 = scalar_select 0, %s13, %s11
  %s16 = sshll.u32 %s0, 4
  %s17 = int_to_ptr.vmem [resolvable:$true] %s16
  %19 = dma.vmem_to_smem %s17, 16, [#allocation3], [#allocation2]
  %21 = dma.done [#allocation2], 16
  %22 = sfence
  $region1: #{tpu_custom_call.1} parent=0
    #allocation4 [shape = 'u8[65536]{0}', space=vmem, size = 0x10000, scoped, tag = 'output window, operand 0']
    #allocation5 [shape = 'u8[65536]{0}', space=vmem, size = 0x10000, scoped, tag = 'output window, operand 1']
    #allocation6 [shape = 'u8[1024]{0}', space=vmem, size = 0x400, scoped, tag = 'output window, operand 2']
    #allocation7 [shape = 's32[2]{0}', space=sflag, size = 0x8, scoped, tag = 'scoped memory for tpu_custom_call.1']
    #allocation8 [shape = 'u8[1024]{0}', space=vmem, size = 0x400, scoped, tag = 'output window, operand 3']
    #allocation9 [shape = 's32[2]{0}', space=sflag, size = 0x8, scoped, tag = 'scoped memory for tpu_custom_call.1']
    #allocation10 [shape = 'u8[1024]{0}', space=vmem, size = 0x400, scoped, tag = 'output window, operand 4']
    %23 = vsyncpa [#allocation7], 0
    %s24 = scalar_lea.sflag [#allocation7], 1
    %25 = vsyncpa %s24, 0
    %26 = vsyncpa [#allocation9], 0
    %s27 = scalar_lea.sflag [#allocation9], 1
    %28 = vsyncpa %s27, 0
    loop: start=0, step=1, limit=6
    $region2: #{tpu_custom_call.1} parent=1 // loop_pre_header
      _
    $region3: #{tpu_custom_call.1} parent=1 // loop_header
      %s30 = sphi 0, %s34
      %p31 = scmp.ge.s32.totalorder %s30, 6
      %s37 = sphi 0, %s49
      %s38 = sphi 0, %s45
      %s39 = sphi 0, %s37
      %s40 = sphi 0, %s38
      %s41 = sphi 0, %s39
      %s42 = sphi 0, %s40
      %s52 = sphi 0, %s54
      %s55 = sphi 0, %s52
      %s56 = sphi 0, %s55
      %s72 = sphi 0, %s56
      %s78 = sphi 0, %s80
      %s81 = sphi 0, %s78
      %s82 = sphi 0, %s81
      %s98 = sphi 0, %s82
      %s106 = sphi 0, %s108
      %s109 = sphi 0, %s106
      %s110 = sphi 0, %s109
      %s126 = sphi 0, %s110
      %s134 = sphi 0, %s136
      %s137 = sphi 0, %s134
      %s138 = sphi 0, %s137
      %s154 = sphi 0, %s138
      %s162 = sphi 0, %s164
      %s165 = sphi 0, %s162
      %s166 = sphi 0, %s165
      %s182 = sphi 0, %s166
      %s190 = sphi 0, %s192
      %s193 = sphi 0, %s190
      %s194 = sphi 0, %s193
      %s210 = sphi 0, %s194
      %s218 = sphi 0, %s220
      %s221 = sphi 0, %s218
      %s222 = sphi 0, %s221
      %s238 = sphi 0, %s222
      %s246 = sphi 0, %s248
      %s249 = sphi 0, %s246
      %s250 = sphi 0, %s249
      %s266 = sphi 0, %s250
      %s274 = sphi 0, %s276
      %s277 = sphi 0, %s274
      %s278 = sphi 0, %s277
      %s294 = sphi 0, %s278
    $region4: #{tpu_custom_call.1} parent=1 // loop_header_branch
      %33 = sbr.rel (%p31) target = $region8
    $region5: #{tpu_custom_call.1} parent=1 // loop_body
      %s35 = ssub.s32 %s30, 1
      %s36 = ssub.s32 %s30, 2
      %s43 = sadd.s32 1, %s38
      %p44 = scmp.ge.s32.totalorder %s43, 2
      %s45 = scalar_select %p44, 0, %s43
      %s46 = sadd.s32 1, %s37
      %s47 = scalar_select %p44, %s46, %s37
      %p48 = scmp.ge.s32.totalorder %s47, 2
      %s49 = scalar_select %p48, 0, %s47
      %s50 = ssub.s32 %s37, %s49
      %p51 = scmp.eq.s32.totalorder %s50, 0
      %s53 = sadd.s32 %s52, 1
      %s54 = scalar_select %p51, %s52, %s53
      %p57 = pneg %p51
      %p58 = scmp.eq.s32.totalorder %s30, 3
      %p59 = por %p57, %p58
      %p60 = scmp.ne.s32.totalorder %s52, %s55
      %p61 = scmp.eq.s32.totalorder %s30, 0
      %p62 = por %p60, %p61
      %p63 = scmp.ne.s32.totalorder %s52, %s55
      %p64 = scmp.eq.s32.totalorder %s35, 3
      %p65 = por %p63, %p64
      %p66 = scmp.ne.s32.totalorder %s55, %s56
      %p67 = scmp.eq.s32.totalorder %s35, 0
      %p68 = por %p66, %p67
      %p69 = scmp.ne.s32.totalorder %s55, %s56
      %p70 = scmp.eq.s32.totalorder %s36, 3
      %p71 = por %p69, %p70
      %p73 = scmp.ne.s32.totalorder %s56, %s72
      %p74 = scmp.eq.s32.totalorder %s36, 0
      %p75 = por %p73, %p74
      %s76 = ssub.s32 %s38, %s45
      %p77 = scmp.eq.s32.totalorder %s76, 0
      %s79 = sadd.s32 %s78, 1
      %s80 = scalar_select %p77, %s78, %s79
      %p83 = pneg %p77
      %p84 = scmp.eq.s32.totalorder %s30, 3
      %p85 = por %p83, %p84
      %p86 = scmp.ne.s32.totalorder %s78, %s81
      %p87 = scmp.eq.s32.totalorder %s30, 0
      %p88 = por %p86, %p87
      %p89 = scmp.ne.s32.totalorder %s78, %s81
      %p90 = scmp.eq.s32.totalorder %s35, 3
      %p91 = por %p89, %p90
      %p92 = scmp.ne.s32.totalorder %s81, %s82
      %p93 = scmp.eq.s32.totalorder %s35, 0
      %p94 = por %p92, %p93
      %p95 = scmp.ne.s32.totalorder %s81, %s82
      %p96 = scmp.eq.s32.totalorder %s36, 3
      %p97 = por %p95, %p96
      %p99 = scmp.ne.s32.totalorder %s82, %s98
      %p100 = scmp.eq.s32.totalorder %s36, 0
      %p101 = por %p99, %p100
      %s102 = ssub.s32 %s37, %s49
      %s103 = ssub.s32 %s38, %s45
      %s104 = sor.u32 %s102, %s103
      %p105 = scmp.eq.s32.totalorder %s104, 0
      %s107 = sadd.s32 %s106, 1
      %s108 = scalar_select %p105, %s106, %s107
      %p111 = pneg %p105
      %p112 = scmp.eq.s32.totalorder %s30, 3
      %p113 = por %p111, %p112
      %p114 = scmp.ne.s32.totalorder %s106, %s109
      %p115 = scmp.eq.s32.totalorder %s30, 0
      %p116 = por %p114, %p115
      %p117 = scmp.ne.s32.totalorder %s106, %s109
      %p118 = scmp.eq.s32.totalorder %s35, 3
      %p119 = por %p117, %p118
      %p120 = scmp.ne.s32.totalorder %s109, %s110
      %p121 = scmp.eq.s32.totalorder %s35, 0
      %p122 = por %p120, %p121
      %p123 = scmp.ne.s32.totalorder %s109, %s110
      %p124 = scmp.eq.s32.totalorder %s36, 3
      %p125 = por %p123, %p124
      %p127 = scmp.ne.s32.totalorder %s110, %s126
      %p128 = scmp.eq.s32.totalorder %s36, 0
      %p129 = por %p127, %p128
      %s130 = ssub.s32 %s37, %s49
      %s131 = ssub.s32 %s38, %s45
      %s132 = sor.u32 %s130, %s131
      %p133 = scmp.eq.s32.totalorder %s132, 0
      %s135 = sadd.s32 %s134, 1
      %s136 = scalar_select %p133, %s134, %s135
      %p139 = pneg %p133
      %p140 = scmp.eq.s32.totalorder %s30, 3
      %p141 = por %p139, %p140
      %p142 = scmp.ne.s32.totalorder %s134, %s137
      %p143 = scmp.eq.s32.totalorder %s30, 0
      %p144 = por %p142, %p143
      %p145 = scmp.ne.s32.totalorder %s134, %s137
      %p146 = scmp.eq.s32.totalorder %s35, 3
      %p147 = por %p145, %p146
      %p148 = scmp.ne.s32.totalorder %s137, %s138
      %p149 = scmp.eq.s32.totalorder %s35, 0
      %p150 = por %p148, %p149
      %p151 = scmp.ne.s32.totalorder %s137, %s138
      %p152 = scmp.eq.s32.totalorder %s36, 3
      %p153 = por %p151, %p152
      %p155 = scmp.ne.s32.totalorder %s138, %s154
      %p156 = scmp.eq.s32.totalorder %s36, 0
      %p157 = por %p155, %p156
      %s158 = ssub.s32 %s37, %s49
      %s159 = ssub.s32 %s38, %s45
      %s160 = sor.u32 %s158, %s159
      %p161 = scmp.eq.s32.totalorder %s160, 0
      %s163 = sadd.s32 %s162, 1
      %s164 = scalar_select %p161, %s162, %s163
      %p167 = pneg %p161
      %p168 = scmp.eq.s32.totalorder %s30, 3
      %p169 = por %p167, %p168
      %p170 = scmp.ne.s32.totalorder %s162, %s165
      %p171 = scmp.eq.s32.totalorder %s30, 0
      %p172 = por %p170, %p171
      %p173 = scmp.ne.s32.totalorder %s162, %s165
      %p174 = scmp.eq.s32.totalorder %s35, 3
      %p175 = por %p173, %p174
      %p176 = scmp.ne.s32.totalorder %s165, %s166
      %p177 = scmp.eq.s32.totalorder %s35, 0
      %p178 = por %p176, %p177
      %p179 = scmp.ne.s32.totalorder %s165, %s166
      %p180 = scmp.eq.s32.totalorder %s36, 3
      %p181 = por %p179, %p180
      %p183 = scmp.ne.s32.totalorder %s166, %s182
      %p184 = scmp.eq.s32.totalorder %s36, 0
      %p185 = por %p183, %p184
      %s186 = ssub.s32 %s37, %s49
      %s187 = ssub.s32 %s38, %s45
      %s188 = sor.u32 %s186, %s187
      %p189 = scmp.eq.s32.totalorder %s188, 0
      %s191 = sadd.s32 %s190, 1
      %s192 = scalar_select %p189, %s190, %s191
      %p195 = pneg %p189
      %p196 = scmp.eq.s32.totalorder %s30, 3
      %p197 = por %p195, %p196
      %p198 = scmp.ne.s32.totalorder %s190, %s193
      %p199 = scmp.eq.s32.totalorder %s30, 0
      %p200 = por %p198, %p199
      %p201 = scmp.ne.s32.totalorder %s190, %s193
      %p202 = scmp.eq.s32.totalorder %s35, 3
      %p203 = por %p201, %p202
      %p204 = scmp.ne.s32.totalorder %s193, %s194
      %p205 = scmp.eq.s32.totalorder %s35, 0
      %p206 = por %p204, %p205
      %p207 = scmp.ne.s32.totalorder %s193, %s194
      %p208 = scmp.eq.s32.totalorder %s36, 3
      %p209 = por %p207, %p208
      %p211 = scmp.ne.s32.totalorder %s194, %s210
      %p212 = scmp.eq.s32.totalorder %s36, 0
      %p213 = por %p211, %p212
      %s214 = ssub.s32 %s37, %s49
      %s215 = ssub.s32 %s38, %s45
      %s216 = sor.u32 %s214, %s215
      %p217 = scmp.eq.s32.totalorder %s216, 0
      %s219 = sadd.s32 %s218, 1
      %s220 = scalar_select %p217, %s218, %s219
      %p223 = pneg %p217
      %p224 = scmp.eq.s32.totalorder %s30, 3
      %p225 = por %p223, %p224
      %p226 = scmp.ne.s32.totalorder %s218, %s221
      %p227 = scmp.eq.s32.totalorder %s30, 0
      %p228 = por %p226, %p227
      %p229 = scmp.ne.s32.totalorder %s218, %s221
      %p230 = scmp.eq.s32.totalorder %s35, 3
      %p231 = por %p229, %p230
      %p232 = scmp.ne.s32.totalorder %s221, %s222
      %p233 = scmp.eq.s32.totalorder %s35, 0
      %p234 = por %p232, %p233
      %p235 = scmp.ne.s32.totalorder %s221, %s222
      %p236 = scmp.eq.s32.totalorder %s36, 3
      %p237 = por %p235, %p236
      %p239 = scmp.ne.s32.totalorder %s222, %s238
      %p240 = scmp.eq.s32.totalorder %s36, 0
      %p241 = por %p239, %p240
      %s242 = ssub.s32 %s37, %s49
      %s243 = ssub.s32 %s38, %s45
      %s244 = sor.u32 %s242, %s243
      %p245 = scmp.eq.s32.totalorder %s244, 0
      %s247 = sadd.s32 %s246, 1
      %s248 = scalar_select %p245, %s246, %s247
      %p251 = pneg %p245
      %p252 = scmp.eq.s32.totalorder %s30, 3
      %p253 = por %p251, %p252
      %p254 = scmp.ne.s32.totalorder %s246, %s249
      %p255 = scmp.eq.s32.totalorder %s30, 0
      %p256 = por %p254, %p255
      %p257 = scmp.ne.s32.totalorder %s246, %s249
      %p258 = scmp.eq.s32.totalorder %s35, 3
      %p259 = por %p257, %p258
      %p260 = scmp.ne.s32.totalorder %s249, %s250
      %p261 = scmp.eq.s32.totalorder %s35, 0
      %p262 = por %p260, %p261
      %p263 = scmp.ne.s32.totalorder %s249, %s250
      %p264 = scmp.eq.s32.totalorder %s36, 3
      %p265 = por %p263, %p264
      %p267 = scmp.ne.s32.totalorder %s250, %s266
      %p268 = scmp.eq.s32.totalorder %s36, 0
      %p269 = por %p267, %p268
      %s270 = ssub.s32 %s37, %s49
      %s271 = ssub.s32 %s38, %s45
      %s272 = sor.u32 %s270, %s271
      %p273 = scmp.eq.s32.totalorder %s272, 0
      %s275 = sadd.s32 %s274, 1
      %s276 = scalar_select %p273, %s274, %s275
      %p279 = pneg %p273
      %p280 = scmp.eq.s32.totalorder %s30, 3
      %p281 = por %p279, %p280
      %p282 = scmp.ne.s32.totalorder %s274, %s277
      %p283 = scmp.eq.s32.totalorder %s30, 0
      %p284 = por %p282, %p283
      %p285 = scmp.ne.s32.totalorder %s274, %s277
      %p286 = scmp.eq.s32.totalorder %s35, 3
      %p287 = por %p285, %p286
      %p288 = scmp.ne.s32.totalorder %s277, %s278
      %p289 = scmp.eq.s32.totalorder %s35, 0
      %p290 = por %p288, %p289
      %p291 = scmp.ne.s32.totalorder %s277, %s278
      %p292 = scmp.eq.s32.totalorder %s36, 3
      %p293 = por %p291, %p292
      %p295 = scmp.ne.s32.totalorder %s278, %s294
      %p296 = scmp.eq.s32.totalorder %s36, 0
      %p297 = por %p295, %p296
      %p298 = scmp.le.s32.totalorder 1, %s30
      %p299 = scmp.lt.s32.totalorder %s30, 5
      %p300 = pnand %p298, %p299
      %p301 = pneg %p300
      // Predicated region
      $region9: #{tpu_custom_call.1} parent=5 // pred_check
        _
      $region10: #{tpu_custom_call.1} parent=5 // pred_check_branch
        %303 = sbr.rel (%p300) target = $region12
      $region11: #{tpu_custom_call.1} parent=5 // pred_region
        %s304 = ssub.s32 %s30, 1
      $region12: #{tpu_custom_call.1} parent=5 // pred_fallthru
        _
      %p305 = scmp.lt.s32.totalorder %s30, 4
      // Predicated region
      $region13: #{tpu_custom_call.1} parent=5 // pred_check
        %p306 = pneg %p305
      $region14: #{tpu_custom_call.1} parent=5 // pred_check_branch
        %308 = sbr.rel (%p306) target = $region16
      $region15: #{tpu_custom_call.1} parent=5 // pred_region
        // Predicated region
        $region17: #{tpu_custom_call.1} parent=15 // pred_check
          %p309 = pneg %p62
        $region18: #{tpu_custom_call.1} parent=15 // pred_check_branch
          %311 = sbr.rel (%p309) target = $region20
        $region19: #{tpu_custom_call.1} parent=15 // pred_region
          %p312 = scmp.lt.s32.totalorder %s37, 1
          %s313 = scalar_select %p312, %s37, 1
          %s314 = smul.addr %s313, 2
          %s315 = smul.addr %s314, 4
          %s316 = scalar_lea.vmem %s1, %s315
        $region20: #{tpu_custom_call.1} parent=15 // pred_fallthru
          _
        // Predicated region
        $region21: #{tpu_custom_call.1} parent=15 // pred_check
          %p317 = pneg %p88
        $region22: #{tpu_custom_call.1} parent=15 // pred_check_branch
          %319 = sbr.rel (%p317) target = $region24
        $region23: #{tpu_custom_call.1} parent=15 // pred_region
          %s320 = smul.u32 8, %s38
          %p321 = scmp.lt.s32.totalorder %s320, 15
          %s322 = scalar_select %p321, %s320, 15
          %s323 = smul.addr %s322, 4
          %s324 = scalar_lea.vmem %s2, %s323
          %s325 = smul.u32 8, %s38
        $region24: #{tpu_custom_call.1} parent=15 // pred_fallthru
          _
        // Predicated region
        $region25: #{tpu_custom_call.1} parent=15 // pred_check
          %p326 = pneg %p116
        $region26: #{tpu_custom_call.1} parent=15 // pred_check_branch
          %328 = sbr.rel (%p326) target = $region28
        $region27: #{tpu_custom_call.1} parent=15 // pred_region
          %s329 = smul.u32 8, %s38
          %s330 = ssub.s32 13, %s329
          %p331 = scmp.lt.s32.totalorder %s330, 8
          %s332 = scalar_select %p331, %s330, 8
          %s333 = smul.u32 8, %s332
          %s334 = smul.u32 %s333, 2
          %p335 = scmp.lt.s32.totalorder %s37, 1
          %s336 = scalar_select %p335, %s37, 1
          %p337 = scmp.lt.s32.totalorder %s329, 12
          %s338 = scalar_select %p337, %s329, 12
          %s339 = smul.addr %s338, 2
          %s340 = smul.addr %s336, 26
          %s341 = sadd.s32 %s339, %s340
          %s342 = smul.addr %s341, 8
          %s343 = scalar_lea.vmem %s3, %s342
          %s344 = smul.u32 8, %s38
          %s345 = ssub.s32 13, %s344
          %p346 = scmp.lt.s32.totalorder %s345, 8
          %s347 = scalar_select %p346, %s345, 8
          %s348 = smul.u32 8, %s347
          %s349 = smul.u32 %s348, 2
        $region28: #{tpu_custom_call.1} parent=15 // pred_fallthru
          _
        // Predicated region
        $region29: #{tpu_custom_call.1} parent=15 // pred_check
          %p350 = pneg %p144
        $region30: #{tpu_custom_call.1} parent=15 // pred_check_branch
          %352 = sbr.rel (%p350) target = $region32
        $region31: #{tpu_custom_call.1} parent=15 // pred_region
          %s353 = smul.u32 8, %s38
          %s354 = ssub.s32 13, %s353
          %p355 = scmp.lt.s32.totalorder %s354, 8
          %s356 = scalar_select %p355, %s354, 8
          %s357 = smul.u32 8, %s356
          %s358 = smul.u32 %s357, 2
          %p359 = scmp.lt.s32.totalorder %s37, 1
          %s360 = scalar_select %p359, %s37, 1
          %p361 = scmp.lt.s32.totalorder %s353, 12
          %s362 = scalar_select %p361, %s353, 12
          %s363 = smul.addr %s362, 2
          %s364 = smul.addr %s360, 26
          %s365 = sadd.s32 %s363, %s364
          %s366 = smul.addr %s365, 8
          %s367 = scalar_lea.vmem %s4, %s366
          %s368 = smul.u32 8, %s38
          %s369 = ssub.s32 13, %s368
          %p370 = scmp.lt.s32.totalorder %s369, 8
          %s371 = scalar_select %p370, %s369, 8
          %s372 = smul.u32 8, %s371
          %s373 = smul.u32 %s372, 2
        $region32: #{tpu_custom_call.1} parent=15 // pred_fallthru
          _
      $region16: #{tpu_custom_call.1} parent=5 // pred_fallthru
        _
      %p374 = scmp.le.s32.totalorder 1, %s30
      %p375 = scmp.lt.s32.totalorder %s30, 5
      %p376 = pnand %p374, %p375
      %p377 = pneg %p376
      // Predicated region
      $region33: #{tpu_custom_call.1} parent=5 // pred_check
        _
      $region34: #{tpu_custom_call.1} parent=5 // pred_check_branch
        %379 = sbr.rel (%p376) target = $region36
      $region35: #{tpu_custom_call.1} parent=5 // pred_region
        %s380 = ssub.s32 %s30, 1
        %p381 = scmp.lt.s32.totalorder %s39, 1
        %s382 = scalar_select %p381, %s39, 1
        %s383 = smul.addr %s382, 2
        %s384 = smul.addr %s383, 4
        %s385 = scalar_lea.vmem %s1, %s384
        %p386 = pneg %p68
        %p387 = pneg %p65
        %s388 = smul.u32 8, %s40
        %p389 = scmp.lt.s32.totalorder %s388, 15
        %s390 = scalar_select %p389, %s388, 15
        %s391 = smul.addr %s390, 4
        %s392 = scalar_lea.vmem %s2, %s391
        %p393 = pneg %p94
        %p394 = pneg %p91
        %s395 = smul.u32 8, %s40
        %s396 = ssub.s32 13, %s395
        %p397 = scmp.lt.s32.totalorder %s396, 8
        %s398 = scalar_select %p397, %s396, 8
        %s399 = smul.u32 8, %s398
        %s400 = smul.u32 %s399, 2
        %p401 = scmp.lt.s32.totalorder %s39, 1
        %s402 = scalar_select %p401, %s39, 1
        %p403 = scmp.lt.s32.totalorder %s395, 12
        %s404 = scalar_select %p403, %s395, 12
        %s405 = smul.addr %s404, 2
        %s406 = smul.addr %s402, 26
        %s407 = sadd.s32 %s405, %s406
        %s408 = smul.addr %s407, 8
        %s409 = scalar_lea.vmem %s3, %s408
        %p410 = pneg %p122
        %p411 = pneg %p119
        %s412 = smul.u32 8, %s40
        %s413 = ssub.s32 13, %s412
        %p414 = scmp.lt.s32.totalorder %s413, 8
        %s415 = scalar_select %p414, %s413, 8
        %s416 = smul.u32 8, %s415
        %s417 = smul.u32 %s416, 2
        %p418 = scmp.lt.s32.totalorder %s39, 1
        %s419 = scalar_select %p418, %s39, 1
        %p420 = scmp.lt.s32.totalorder %s412, 12
        %s421 = scalar_select %p420, %s412, 12
        %s422 = smul.addr %s421, 2
        %s423 = smul.addr %s419, 26
        %s424 = sadd.s32 %s422, %s423
        %s425 = smul.addr %s424, 8
        %s426 = scalar_lea.vmem %s4, %s425
        %p427 = pneg %p150
        %p428 = pneg %p147
        %p429 = pneg %p178
        %p430 = pneg %p175
        %s431 = sand.u32 %s165, 1
        %s432 = sand.u32 %s165, 1
        %s433 = smul.addr %s432, 64
        %s434 = scalar_lea.vmem [#allocation4], %s433
        %p435 = pneg %p206
        %p436 = pneg %p203
        %s437 = sand.u32 %s193, 1
        %s438 = sand.u32 %s193, 1
        %s439 = smul.addr %s438, 64
        %s440 = scalar_lea.vmem [#allocation5], %s439
        %p441 = pneg %p234
        %p442 = pneg %p231
        %s443 = sand.u32 %s221, 1
        %s444 = scalar_lea.sflag [#allocation7], %s443
        %s445 = sand.u32 %s221, 1
        %s446 = scalar_lea.vmem [#allocation6], %s445
        %p447 = pneg %p262
        %p448 = pneg %p259
        %s449 = sand.u32 %s35, 1
        %s450 = scalar_lea.sflag [#allocation9], %s449
        %s451 = sand.u32 %s249, 1
        %s452 = scalar_lea.vmem [#allocation8], %s451
        %p453 = pneg %p290
        %p454 = pneg %p287
        %s455 = sand.u32 %s35, 1
        %s456 = scalar_lea.sflag [#allocation9], %s455
        %s457 = sand.u32 %s277, 1
        %s458 = scalar_lea.vmem [#allocation10], %s457
        %p459 = scmp.lt.s32.totalorder %s39, 1
        %s460 = scalar_select %p459, %s39, 1
        %s461 = smul.addr %s460, 2
        %s462 = smul.addr %s461, 4
        %s463 = scalar_lea.vmem %s1, %s462
        %s464 = smul.u32 8, %s40
        %p465 = scmp.lt.s32.totalorder %s464, 15
        %s466 = scalar_select %p465, %s464, 15
        %s467 = smul.addr %s466, 4
        %s468 = scalar_lea.vmem %s2, %s467
        %s469 = smul.u32 8, %s40
        %s470 = smul.u32 8, %s40
        %s471 = ssub.s32 13, %s470
        %p472 = scmp.lt.s32.totalorder %s471, 8
        %s473 = scalar_select %p472, %s471, 8
        %s474 = smul.u32 8, %s473
        %s475 = smul.u32 %s474, 2
        %p476 = scmp.lt.s32.totalorder %s39, 1
        %s477 = scalar_select %p476, %s39, 1
        %p478 = scmp.lt.s32.totalorder %s470, 12
        %s479 = scalar_select %p478, %s470, 12
        %s480 = smul.addr %s479, 2
        %s481 = smul.addr %s477, 26
        %s482 = sadd.s32 %s480, %s481
        %s483 = smul.addr %s482, 8
        %s484 = scalar_lea.vmem %s3, %s483
        %s485 = smul.u32 8, %s40
        %s486 = ssub.s32 13, %s485
        %p487 = scmp.lt.s32.totalorder %s486, 8
        %s488 = scalar_select %p487, %s486, 8
        %s489 = smul.u32 8, %s488
        %s490 = smul.u32 %s489, 2
        %s491 = smul.u32 8, %s40
        %s492 = ssub.s32 13, %s491
        %p493 = scmp.lt.s32.totalorder %s492, 8
        %s494 = scalar_select %p493, %s492, 8
        %s495 = smul.u32 8, %s494
        %s496 = smul.u32 %s495, 2
        %p497 = scmp.lt.s32.totalorder %s39, 1
        %s498 = scalar_select %p497, %s39, 1
        %p499 = scmp.lt.s32.totalorder %s491, 12
        %s500 = scalar_select %p499, %s491, 12
        %s501 = smul.addr %s500, 2
        %s502 = smul.addr %s498, 26
        %s503 = sadd.s32 %s501, %s502
        %s504 = smul.addr %s503, 8
        %s505 = scalar_lea.vmem %s4, %s504
        %s506 = smul.u32 8, %s40
        %s507 = ssub.s32 13, %s506
        %p508 = scmp.lt.s32.totalorder %s507, 8
        %s509 = scalar_select %p508, %s507, 8
        %s510 = smul.u32 8, %s509
        %s511 = smul.u32 %s510, 2
        %s512 = smul.u32 8, %s40
        %s513 = ssub.s32 13, %s512
        %p514 = scmp.lt.s32.totalorder %s513, 8
        %s515 = scalar_select %p514, %s513, 8
        %s516 = smul.u32 4, %s515
        %s517 = smul.u32 %s516, 2
        %s518 = smul.u32 8, %s40
        %s519 = ssub.s32 13, %s518
        %p520 = scmp.lt.s32.totalorder %s519, 8
        %s521 = scalar_select %p520, %s519, 8
        %s522 = smul.u32 4, %s521
        %s523 = smul.u32 %s522, 2
        %v525 = vld [vmem:[%s468] sm:$0xf]
        %v526 = vld [vmem:[%s468 + $0x4] sm:$0xf]
        %v527 = vld [vmem:[%s468 + $0x8] sm:$0xf]
        %v528 = vld [vmem:[%s468 + $0xc] sm:$0xf]
        %v529 = vld [vmem:[%s468 + $0x10] sm:$0xf]
        %v530 = vld [vmem:[%s468 + $0x14] sm:$0xf]
        %v531 = vld [vmem:[%s468 + $0x18] sm:$0xf]
        %v532 = vld [vmem:[%s468 + $0x1c] sm:$0xf]
        %v533 = vld [vmem:[%s463] sm:$0xff]
        %v542 = vunpack.c.l.b16 %v525
        %v543 = vunpack.c.l.b16 %v526
        %v544 = vunpack.c.l.b16 %v527
        %v545 = vunpack.c.l.b16 %v528
        %v546 = vunpack.c.l.b16 %v529
        %v547 = vunpack.c.l.b16 %v530
        %v548 = vunpack.c.l.b16 %v531
        %v549 = vunpack.c.l.b16 %v532
        %v550 = vpack.c.b16 %v543, %v542
        %v551 = vpack.c.b16 %v545, %v544
        %v552 = vpack.c.b16 %v547, %v546
        %v553 = vpack.c.b16 %v549, %v548
        %v555 = vunpack.c.l.b16 %v533
        %v556 = vunpack.c.h.b16 %v533
        %v557 = vpack.c.b16 %v555, %v555
        %v558 = vpack.c.b16 %v556, %v556
        %vm559 = vcmask 64512
        %v561 = vsel %vm559, %v550, 0
        %v564 = vsel %vm559, %v551, 0
        %v567 = vsel %vm559, %v552, 0
        %v570 = vsel %vm559, %v553, 0
        %vm572 = vcmask 1043456
        %v574 = vsel %vm572, %v557, 0
        %v577 = vsel %vm572, %v558, 0
        %579 = vmatpush.bf16.msra.mxu0 0
        %580 = vmatpush.bf16.msra.mxu0 0
        %581 = vmatpush.bf16.msra.mxu0 0
        %582 = vmatpush.bf16.msra.mxu0 0
        %583 = vmatpush.bf16.msra.mxu0 0
        %584 = vmatpush.bf16.msra.mxu0 0
        %585 = vmatpush.bf16.msra.mxu0 0
        %586 = vmatpush.bf16.msra.mxu0 %v574
        %587 = vmatmul.bf16.gmra.mxu0 %v561
        %v588 = vpop.f32.mrf.mxu0
        %v589 = vadd.f32 0.0, %v588
        %v590 = vpop.f32.mrf.mxu0
        %v591 = vadd.f32 0.0, %v590
        %592 = vmatmul.bf16.gmra.mxu0 %v564
        %v593 = vpop.f32.mrf.mxu0
        %v594 = vadd.f32 0.0, %v593
        %v595 = vpop.f32.mrf.mxu0
        %v596 = vadd.f32 0.0, %v595
        %597 = vmatmul.bf16.gmra.mxu0 %v567
        %v598 = vpop.f32.mrf.mxu0
        %v599 = vadd.f32 0.0, %v598
        %v600 = vpop.f32.mrf.mxu0
        %v601 = vadd.f32 0.0, %v600
        %602 = vmatmul.bf16.gmra.mxu0 %v570
        %v603 = vpop.f32.mrf.mxu0
        %v604 = vadd.f32 0.0, %v603
        %v605 = vpop.f32.mrf.mxu0
        %v606 = vadd.f32 0.0, %v605
        %607 = vdwg.mxu0
        %608 = vmatpush.bf16.msra.mxu0 0
        %609 = vmatpush.bf16.msra.mxu0 0
        %610 = vmatpush.bf16.msra.mxu0 0
        %611 = vmatpush.bf16.msra.mxu0 0
        %612 = vmatpush.bf16.msra.mxu0 0
        %613 = vmatpush.bf16.msra.mxu0 0
        %614 = vmatpush.bf16.msra.mxu0 0
        %615 = vmatpush.bf16.msra.mxu0 %v577
        %616 = vmatmul.bf16.gmra.mxu0 %v561
        %v617 = vpop.f32.mrf.mxu0
        %v618 = vadd.f32 0.0, %v617
        %v619 = vpop.f32.mrf.mxu0
        %v620 = vadd.f32 0.0, %v619
        %621 = vmatmul.bf16.gmra.mxu0 %v564
        %v622 = vpop.f32.mrf.mxu0
        %v623 = vadd.f32 0.0, %v622
        %v624 = vpop.f32.mrf.mxu0
        %v625 = vadd.f32 0.0, %v624
        %626 = vmatmul.bf16.gmra.mxu0 %v567
        %v627 = vpop.f32.mrf.mxu0
        %v628 = vadd.f32 0.0, %v627
        %v629 = vpop.f32.mrf.mxu0
        %v630 = vadd.f32 0.0, %v629
        %631 = vmatmul.bf16.gmra.mxu0 %v570
        %v632 = vpop.f32.mrf.mxu0
        %v633 = vadd.f32 0.0, %v632
        %v634 = vpop.f32.mrf.mxu0
        %v635 = vadd.f32 0.0, %v634
        %636 = vdwg.mxu0
        %v637 = vmul.f32 %v589, 200.0
        %v638 = vmul.f32 %v618, 200.0
        %v639 = vmul.f32 %v591, 200.0
        %v640 = vmul.f32 %v620, 200.0
        %v641 = vmul.f32 %v594, 200.0
        %v642 = vmul.f32 %v623, 200.0
        %v643 = vmul.f32 %v596, 200.0
        %v644 = vmul.f32 %v625, 200.0
        %v645 = vmul.f32 %v599, 200.0
        %v646 = vmul.f32 %v628, 200.0
        %v647 = vmul.f32 %v601, 200.0
        %v648 = vmul.f32 %v630, 200.0
        %v649 = vmul.f32 %v604, 200.0
        %v650 = vmul.f32 %v633, 200.0
        %v651 = vmul.f32 %v606, 200.0
        %v652 = vmul.f32 %v635, 200.0
        %vm653 = vcmp.gt.f32.partialorder %v637, 0.0
        %vm654 = vcmp.gt.f32.partialorder %v638, 0.0
        %vm655 = vcmp.gt.f32.partialorder %v639, 0.0
        %vm656 = vcmp.gt.f32.partialorder %v640, 0.0
        %vm657 = vcmp.gt.f32.partialorder %v641, 0.0
        %vm658 = vcmp.gt.f32.partialorder %v642, 0.0
        %vm659 = vcmp.gt.f32.partialorder %v643, 0.0
        %vm660 = vcmp.gt.f32.partialorder %v644, 0.0
        %vm661 = vcmp.gt.f32.partialorder %v645, 0.0
        %vm662 = vcmp.gt.f32.partialorder %v646, 0.0
        %vm663 = vcmp.gt.f32.partialorder %v647, 0.0
        %vm664 = vcmp.gt.f32.partialorder %v648, 0.0
        %vm665 = vcmp.gt.f32.partialorder %v649, 0.0
        %vm666 = vcmp.gt.f32.partialorder %v650, 0.0
        %vm667 = vcmp.gt.f32.partialorder %v651, 0.0
        %vm668 = vcmp.gt.f32.partialorder %v652, 0.0
        %v669 = vsel %vm653, 1, 0
        %v670 = vsel %vm654, 1, 0
        %v671 = vsel %vm655, 1, 0
        %v672 = vsel %vm656, 1, 0
        %v673 = vsel %vm657, 1, 0
        %v674 = vsel %vm658, 1, 0
        %v675 = vsel %vm659, 1, 0
        %v676 = vsel %vm660, 1, 0
        %v677 = vsel %vm661, 1, 0
        %v678 = vsel %vm662, 1, 0
        %v679 = vsel %vm663, 1, 0
        %v680 = vsel %vm664, 1, 0
        %v681 = vsel %vm665, 1, 0
        %v682 = vsel %vm666, 1, 0
        %v683 = vsel %vm667, 1, 0
        %v684 = vsel %vm668, 1, 0
        %v685 = vcvt.s32.f32 %v669
        %v686 = vcvt.s32.f32 %v670
        %v687 = vcvt.s32.f32 %v671
        %v688 = vcvt.s32.f32 %v672
        %v689 = vcvt.s32.f32 %v673
        %v690 = vcvt.s32.f32 %v674
        %v691 = vcvt.s32.f32 %v675
        %v692 = vcvt.s32.f32 %v676
        %v693 = vcvt.s32.f32 %v677
        %v694 = vcvt.s32.f32 %v678
        %v695 = vcvt.s32.f32 %v679
        %v696 = vcvt.s32.f32 %v680
        %v697 = vcvt.s32.f32 %v681
        %v698 = vcvt.s32.f32 %v682
        %v699 = vcvt.s32.f32 %v683
        %v700 = vcvt.s32.f32 %v684
        %v701 = vsub.f32 1.0, %v685
        %v702 = vsub.f32 1.0, %v686
        %v703 = vsub.f32 1.0, %v687
        %v704 = vsub.f32 1.0, %v688
        %v705 = vsub.f32 1.0, %v689
        %v706 = vsub.f32 1.0, %v690
        %v707 = vsub.f32 1.0, %v691
        %v708 = vsub.f32 1.0, %v692
        %v709 = vsub.f32 1.0, %v693
        %v710 = vsub.f32 1.0, %v694
        %v711 = vsub.f32 1.0, %v695
        %v712 = vsub.f32 1.0, %v696
        %v713 = vsub.f32 1.0, %v697
        %v714 = vsub.f32 1.0, %v698
        %v715 = vsub.f32 1.0, %v699
        %v716 = vsub.f32 1.0, %v700
        %v717 = vadd.f32 %v637, %v701
        %v718 = vadd.f32 %v638, %v702
        %v719 = vadd.f32 %v639, %v703
        %v720 = vadd.f32 %v640, %v704
        %v721 = vadd.f32 %v641, %v705
        %v722 = vadd.f32 %v642, %v706
        %v723 = vadd.f32 %v643, %v707
        %v724 = vadd.f32 %v644, %v708
        %v725 = vadd.f32 %v645, %v709
        %v726 = vadd.f32 %v646, %v710
        %v727 = vadd.f32 %v647, %v711
        %v728 = vadd.f32 %v648, %v712
        %v729 = vadd.f32 %v649, %v713
        %v730 = vadd.f32 %v650, %v714
        %v731 = vadd.f32 %v651, %v715
        %v732 = vadd.f32 %v652, %v716
        %v733 = vrcp.pop %v717
        %v734 = vrcp.pop %v718
        %v735 = vrcp.pop %v719
        %v736 = vrcp.pop %v720
        %v737 = vrcp.pop %v721
        %v738 = vrcp.pop %v722
        %v739 = vrcp.pop %v723
        %v740 = vrcp.pop %v724
        %v741 = vrcp.pop %v725
        %v742 = vrcp.pop %v726
        %v743 = vrcp.pop %v727
        %v744 = vrcp.pop %v728
        %v745 = vrcp.pop %v729
        %v746 = vrcp.pop %v730
        %v747 = vrcp.pop %v731
        %v748 = vrcp.pop %v732
        %v749 = vmul.f32 %v717, %v733
        %v750 = vmul.f32 %v718, %v734
        %v751 = vmul.f32 %v719, %v735
        %v752 = vmul.f32 %v720, %v736
        %v753 = vmul.f32 %v721, %v737
        %v754 = vmul.f32 %v722, %v738
        %v755 = vmul.f32 %v723, %v739
        %v756 = vmul.f32 %v724, %v740
        %v757 = vmul.f32 %v725, %v741
        %v758 = vmul.f32 %v726, %v742
        %v759 = vmul.f32 %v727, %v743
        %v760 = vmul.f32 %v728, %v744
        %v761 = vmul.f32 %v729, %v745
        %v762 = vmul.f32 %v730, %v746
        %v763 = vmul.f32 %v731, %v747
        %v764 = vmul.f32 %v732, %v748
        %v765 = vsub.f32 2.0, %v749
        %v766 = vsub.f32 2.0, %v750
        %v767 = vsub.f32 2.0, %v751
        %v768 = vsub.f32 2.0, %v752
        %v769 = vsub.f32 2.0, %v753
        %v770 = vsub.f32 2.0, %v754
        %v771 = vsub.f32 2.0, %v755
        %v772 = vsub.f32 2.0, %v756
        %v773 = vsub.f32 2.0, %v757
        %v774 = vsub.f32 2.0, %v758
        %v775 = vsub.f32 2.0, %v759
        %v776 = vsub.f32 2.0, %v760
        %v777 = vsub.f32 2.0, %v761
        %v778 = vsub.f32 2.0, %v762
        %v779 = vsub.f32 2.0, %v763
        %v780 = vsub.f32 2.0, %v764
        %v781 = vmul.f32 %v733, %v765
        %v782 = vmul.f32 %v734, %v766
        %v783 = vmul.f32 %v735, %v767
        %v784 = vmul.f32 %v736, %v768
        %v785 = vmul.f32 %v737, %v769
        %v786 = vmul.f32 %v738, %v770
        %v787 = vmul.f32 %v739, %v771
        %v788 = vmul.f32 %v740, %v772
        %v789 = vmul.f32 %v741, %v773
        %v790 = vmul.f32 %v742, %v774
        %v791 = vmul.f32 %v743, %v775
        %v792 = vmul.f32 %v744, %v776
        %v793 = vmul.f32 %v745, %v777
        %v794 = vmul.f32 %v746, %v778
        %v795 = vmul.f32 %v747, %v779
        %v796 = vmul.f32 %v748, %v780
        %s797 = sld [smem:[#allocation3 + %s39]]
        %s798 = smul.f32 %s797, 0.54
        %v799 = vstv %s798
        %v800 = vmul.f32 %v799, %v781
        %v801 = vmul.f32 %v799, %v782
        %v802 = vmul.f32 %v799, %v783
        %v803 = vmul.f32 %v799, %v784
        %v804 = vmul.f32 %v799, %v785
        %v805 = vmul.f32 %v799, %v786
        %v806 = vmul.f32 %v799, %v787
        %v807 = vmul.f32 %v799, %v788
        %v808 = vmul.f32 %v799, %v789
        %v809 = vmul.f32 %v799, %v790
        %v810 = vmul.f32 %v799, %v791
        %v811 = vmul.f32 %v799, %v792
        %v812 = vmul.f32 %v799, %v793
        %v813 = vmul.f32 %v799, %v794
        %v814 = vmul.f32 %v799, %v795
        %v815 = vmul.f32 %v799, %v796
        %v816 = vmax.f32 %v800, 0.001
        %v817 = vmax.f32 %v801, 0.001
        %v818 = vmax.f32 %v802, 0.001
        %v819 = vmax.f32 %v803, 0.001
        %v820 = vmax.f32 %v804, 0.001
        %v821 = vmax.f32 %v805, 0.001
        %v822 = vmax.f32 %v806, 0.001
        %v823 = vmax.f32 %v807, 0.001
        %v824 = vmax.f32 %v808, 0.001
        %v825 = vmax.f32 %v809, 0.001
        %v826 = vmax.f32 %v810, 0.001
        %v827 = vmax.f32 %v811, 0.001
        %v828 = vmax.f32 %v812, 0.001
        %v829 = vmax.f32 %v813, 0.001
        %v830 = vmax.f32 %v814, 0.001
        %v831 = vmax.f32 %v815, 0.001
        %v832 = vmin.f32 %v816, 80.0
        %v833 = vmin.f32 %v817, 80.0
        %v834 = vmin.f32 %v818, 80.0
        %v835 = vmin.f32 %v819, 80.0
        %v836 = vmin.f32 %v820, 80.0
        %v837 = vmin.f32 %v821, 80.0
        %v838 = vmin.f32 %v822, 80.0
        %v839 = vmin.f32 %v823, 80.0
        %v840 = vmin.f32 %v824, 80.0
        %v841 = vmin.f32 %v825, 80.0
        %v842 = vmin.f32 %v826, 80.0
        %v843 = vmin.f32 %v827, 80.0
        %v844 = vmin.f32 %v828, 80.0
        %v845 = vmin.f32 %v829, 80.0
        %v846 = vmin.f32 %v830, 80.0
        %v847 = vmin.f32 %v831, 80.0
        %v848 = vpack.c.bf16 %v638, %v637
        %v849 = vpack.c.bf16 %v640, %v639
        %v850 = vpack.c.bf16 %v642, %v641
        %v851 = vpack.c.bf16 %v644, %v643
        %v852 = vpack.c.bf16 %v646, %v645
        %v853 = vpack.c.bf16 %v648, %v647
        %v854 = vpack.c.bf16 %v650, %v649
        %v855 = vpack.c.bf16 %v652, %v651
        %vm856 = vcmask 588804
        %vm857 = vmor %vm856, %vm572
        %858 = vst.msk [vmem:[%s434] sm:$0xff] %vm857, %v848
        %859 = vst.msk [vmem:[%s434 + $0x8] sm:$0xff] %vm857, %v849
        %860 = vst.msk [vmem:[%s434 + $0x10] sm:$0xff] %vm857, %v850
        %861 = vst.msk [vmem:[%s434 + $0x18] sm:$0xff] %vm857, %v851
        %862 = vst.msk [vmem:[%s434 + $0x20] sm:$0xff] %vm857, %v852
        %863 = vst.msk [vmem:[%s434 + $0x28] sm:$0xff] %vm857, %v853
        %864 = vst.msk [vmem:[%s434 + $0x30] sm:$0xff] %vm857, %v854
        %865 = vst.msk [vmem:[%s434 + $0x38] sm:$0xff] %vm857, %v855
        %v866 = vpack.c.bf16 %v833, %v832
        %v867 = vpack.c.bf16 %v835, %v834
        %v868 = vpack.c.bf16 %v837, %v836
        %v869 = vpack.c.bf16 %v839, %v838
        %v870 = vpack.c.bf16 %v841, %v840
        %v871 = vpack.c.bf16 %v843, %v842
        %v872 = vpack.c.bf16 %v845, %v844
        %v873 = vpack.c.bf16 %v847, %v846
        %874 = vst.msk [vmem:[%s440] sm:$0xff] %vm857, %v866
        %875 = vst.msk [vmem:[%s440 + $0x8] sm:$0xff] %vm857, %v867
        %876 = vst.msk [vmem:[%s440 + $0x10] sm:$0xff] %vm857, %v868
        %877 = vst.msk [vmem:[%s440 + $0x18] sm:$0xff] %vm857, %v869
        %878 = vst.msk [vmem:[%s440 + $0x20] sm:$0xff] %vm857, %v870
        %879 = vst.msk [vmem:[%s440 + $0x28] sm:$0xff] %vm857, %v871
        %880 = vst.msk [vmem:[%s440 + $0x30] sm:$0xff] %vm857, %v872
        %881 = vst.msk [vmem:[%s440 + $0x38] sm:$0xff] %vm857, %v873
        %v882 = vld [vmem:[%s484] sm:$0xff]
        %v883 = vld [vmem:[%s484 + $0x8] sm:$0xff]
        %v884 = vld [vmem:[%s484 + $0x10] sm:$0xff]
        %v885 = vld [vmem:[%s484 + $0x18] sm:$0xff]
        %v886 = vld [vmem:[%s484 + $0x20] sm:$0xff]
        %v887 = vld [vmem:[%s484 + $0x28] sm:$0xff]
        %v888 = vld [vmem:[%s484 + $0x30] sm:$0xff]
        %v889 = vld [vmem:[%s484 + $0x38] sm:$0xff]
        %v890 = vld [vmem:[%s484 + $0x40] sm:$0xff]
        %v891 = vld [vmem:[%s484 + $0x48] sm:$0xff]
        %v892 = vld [vmem:[%s484 + $0x50] sm:$0xff]
        %v893 = vld [vmem:[%s484 + $0x58] sm:$0xff]
        %v894 = vld [vmem:[%s484 + $0x60] sm:$0xff]
        %v895 = vld [vmem:[%s484 + $0x68] sm:$0xff]
        %v896 = vld [vmem:[%s484 + $0x70] sm:$0xff]
        %v897 = vld [vmem:[%s484 + $0x78] sm:$0xff]
        %v898 = vlaneseq
        %v899 = vshrl.u32 %v898, 7
        %v900 = vadd.s32 %v899, 8
        %v901 = vadd.s32 %v899, 16
        %v902 = vadd.s32 %v899, 24
        %v903 = vadd.s32 %v899, 32
        %v904 = vadd.s32 %v899, 40
        %v905 = vadd.s32 %v899, 48
        %v906 = vadd.s32 %v899, 56
        %s907 = smul.u32 %s40, 64
        %v908 = vstv %s907
        %v909 = vadd.s32 %v899, %v908
        %v910 = vadd.s32 %v900, %v908
        %v911 = vadd.s32 %v901, %v908
        %v912 = vadd.s32 %v902, %v908
        %v913 = vadd.s32 %v903, %v908
        %v914 = vadd.s32 %v904, %v908
        %v915 = vadd.s32 %v905, %v908
        %v916 = vadd.s32 %v906, %v908
        %v917 = vld [vmem:[%s505] sm:$0xff]
        %v918 = vld [vmem:[%s505 + $0x8] sm:$0xff]
        %v919 = vld [vmem:[%s505 + $0x10] sm:$0xff]
        %v920 = vld [vmem:[%s505 + $0x18] sm:$0xff]
        %v921 = vld [vmem:[%s505 + $0x20] sm:$0xff]
        %v922 = vld [vmem:[%s505 + $0x28] sm:$0xff]
        %v923 = vld [vmem:[%s505 + $0x30] sm:$0xff]
        %v924 = vld [vmem:[%s505 + $0x38] sm:$0xff]
        %v925 = vld [vmem:[%s505 + $0x40] sm:$0xff]
        %v926 = vld [vmem:[%s505 + $0x48] sm:$0xff]
        %v927 = vld [vmem:[%s505 + $0x50] sm:$0xff]
        %v928 = vld [vmem:[%s505 + $0x58] sm:$0xff]
        %v929 = vld [vmem:[%s505 + $0x60] sm:$0xff]
        %v930 = vld [vmem:[%s505 + $0x68] sm:$0xff]
        %v931 = vld [vmem:[%s505 + $0x70] sm:$0xff]
        %v932 = vld [vmem:[%s505 + $0x78] sm:$0xff]
        %vm933 = vcmp.eq.f32.partialorder %v917, 1.0
        %vm934 = vcmp.eq.f32.partialorder %v918, 1.0
        %vm935 = vcmp.eq.f32.partialorder %v919, 1.0
        %vm936 = vcmp.eq.f32.partialorder %v920, 1.0
        %vm937 = vcmp.eq.f32.partialorder %v921, 1.0
        %vm938 = vcmp.eq.f32.partialorder %v922, 1.0
        %vm939 = vcmp.eq.f32.partialorder %v923, 1.0
        %vm940 = vcmp.eq.f32.partialorder %v924, 1.0
        %vm941 = vcmp.eq.f32.partialorder %v925, 1.0
        %vm942 = vcmp.eq.f32.partialorder %v926, 1.0
        %vm943 = vcmp.eq.f32.partialorder %v927, 1.0
        %vm944 = vcmp.eq.f32.partialorder %v928, 1.0
        %vm945 = vcmp.eq.f32.partialorder %v929, 1.0
        %vm946 = vcmp.eq.f32.partialorder %v930, 1.0
        %vm947 = vcmp.eq.f32.partialorder %v931, 1.0
        %vm948 = vcmp.eq.f32.partialorder %v932, 1.0
        %vm949 = vcmp.lt.s32.totalorder %v909, 100
        %vm950 = vcmp.lt.s32.totalorder %v910, 100
        %vm951 = vcmp.lt.s32.totalorder %v911, 100
        %vm952 = vcmp.lt.s32.totalorder %v912, 100
        %vm953 = vcmp.lt.s32.totalorder %v913, 100
        %vm954 = vcmp.lt.s32.totalorder %v914, 100
        %vm955 = vcmp.lt.s32.totalorder %v915, 100
        %vm956 = vcmp.lt.s32.totalorder %v916, 100
        %vm957 = vmand %vm933, %vm949
        %vm958 = vmand %vm934, %vm949
        %vm959 = vmand %vm935, %vm950
        %vm960 = vmand %vm936, %vm950
        %vm961 = vmand %vm937, %vm951
        %vm962 = vmand %vm938, %vm951
        %vm963 = vmand %vm939, %vm952
        %vm964 = vmand %vm940, %vm952
        %vm965 = vmand %vm941, %vm953
        %vm966 = vmand %vm942, %vm953
        %vm967 = vmand %vm943, %vm954
        %vm968 = vmand %vm944, %vm954
        %vm969 = vmand %vm945, %vm955
        %vm970 = vmand %vm946, %vm955
        %vm971 = vmand %vm947, %vm956
        %vm972 = vmand %vm948, %vm956
        %v973 = vsel %vm957, 1, 0
        %v974 = vsel %vm958, 1, 0
        %v975 = vsel %vm959, 1, 0
        %v976 = vsel %vm960, 1, 0
        %v977 = vsel %vm961, 1, 0
        %v978 = vsel %vm962, 1, 0
        %v979 = vsel %vm963, 1, 0
        %v980 = vsel %vm964, 1, 0
        %v981 = vsel %vm965, 1, 0
        %v982 = vsel %vm966, 1, 0
        %v983 = vsel %vm967, 1, 0
        %v984 = vsel %vm968, 1, 0
        %v985 = vsel %vm969, 1, 0
        %v986 = vsel %vm970, 1, 0
        %v987 = vsel %vm971, 1, 0
        %v988 = vsel %vm972, 1, 0
        %v989 = vcvt.s32.f32 %v973
        %v990 = vcvt.s32.f32 %v974
        %v991 = vcvt.s32.f32 %v975
        %v992 = vcvt.s32.f32 %v976
        %v993 = vcvt.s32.f32 %v977
        %v994 = vcvt.s32.f32 %v978
        %v995 = vcvt.s32.f32 %v979
        %v996 = vcvt.s32.f32 %v980
        %v997 = vcvt.s32.f32 %v981
        %v998 = vcvt.s32.f32 %v982
        %v999 = vcvt.s32.f32 %v983
        %v1000 = vcvt.s32.f32 %v984
        %v1001 = vcvt.s32.f32 %v985
        %v1002 = vcvt.s32.f32 %v986
        %v1003 = vcvt.s32.f32 %v987
        %v1004 = vcvt.s32.f32 %v988
        %v1005 = vsel %vm957, %v882, 0.0
        %v1006 = vsel %vm958, %v883, 0.0
        %v1007 = vsel %vm959, %v884, 0.0
        %v1008 = vsel %vm960, %v885, 0.0
        %v1009 = vsel %vm961, %v886, 0.0
        %v1010 = vsel %vm962, %v887, 0.0
        %v1011 = vsel %vm963, %v888, 0.0
        %v1012 = vsel %vm964, %v889, 0.0
        %v1013 = vsel %vm965, %v890, 0.0
        %v1014 = vsel %vm966, %v891, 0.0
        %v1015 = vsel %vm967, %v892, 0.0
        %v1016 = vsel %vm968, %v893, 0.0
        %v1017 = vsel %vm969, %v894, 0.0
        %v1018 = vsel %vm970, %v895, 0.0
        %v1019 = vsel %vm971, %v896, 0.0
        %v1020 = vsel %vm972, %v897, 0.0
        %v1021 = vsub.f32 1.0, %v989
        %v1022 = vsub.f32 1.0, %v990
        %v1023 = vsub.f32 1.0, %v991
        %v1024 = vsub.f32 1.0, %v992
        %v1025 = vsub.f32 1.0, %v993
        %v1026 = vsub.f32 1.0, %v994
        %v1027 = vsub.f32 1.0, %v995
        %v1028 = vsub.f32 1.0, %v996
        %v1029 = vsub.f32 1.0, %v997
        %v1030 = vsub.f32 1.0, %v998
        %v1031 = vsub.f32 1.0, %v999
        %v1032 = vsub.f32 1.0, %v1000
        %v1033 = vsub.f32 1.0, %v1001
        %v1034 = vsub.f32 1.0, %v1002
        %v1035 = vsub.f32 1.0, %v1003
        %v1036 = vsub.f32 1.0, %v1004
        %v1037 = vadd.f32 %v1005, %v1021
        %v1038 = vadd.f32 %v1006, %v1022
        %v1039 = vadd.f32 %v1007, %v1023
        %v1040 = vadd.f32 %v1008, %v1024
        %v1041 = vadd.f32 %v1009, %v1025
        %v1042 = vadd.f32 %v1010, %v1026
        %v1043 = vadd.f32 %v1011, %v1027
        %v1044 = vadd.f32 %v1012, %v1028
        %v1045 = vadd.f32 %v1013, %v1029
        %v1046 = vadd.f32 %v1014, %v1030
        %v1047 = vadd.f32 %v1015, %v1031
        %v1048 = vadd.f32 %v1016, %v1032
        %v1049 = vadd.f32 %v1017, %v1033
        %v1050 = vadd.f32 %v1018, %v1034
        %v1051 = vadd.f32 %v1019, %v1035
        %v1052 = vadd.f32 %v1020, %v1036
        %v1053 = vrcp.pop %v1037
        %v1054 = vrcp.pop %v1038
        %v1055 = vrcp.pop %v1039
        %v1056 = vrcp.pop %v1040
        %v1057 = vrcp.pop %v1041
        %v1058 = vrcp.pop %v1042
        %v1059 = vrcp.pop %v1043
        %v1060 = vrcp.pop %v1044
        %v1061 = vrcp.pop %v1045
        %v1062 = vrcp.pop %v1046
        %v1063 = vrcp.pop %v1047
        %v1064 = vrcp.pop %v1048
        %v1065 = vrcp.pop %v1049
        %v1066 = vrcp.pop %v1050
        %v1067 = vrcp.pop %v1051
        %v1068 = vrcp.pop %v1052
        %v1069 = vmul.f32 %v1037, %v1053
        %v1070 = vmul.f32 %v1038, %v1054
        %v1071 = vmul.f32 %v1039, %v1055
        %v1072 = vmul.f32 %v1040, %v1056
        %v1073 = vmul.f32 %v1041, %v1057
        %v1074 = vmul.f32 %v1042, %v1058
        %v1075 = vmul.f32 %v1043, %v1059
        %v1076 = vmul.f32 %v1044, %v1060
        %v1077 = vmul.f32 %v1045, %v1061
        %v1078 = vmul.f32 %v1046, %v1062
        %v1079 = vmul.f32 %v1047, %v1063
        %v1080 = vmul.f32 %v1048, %v1064
        %v1081 = vmul.f32 %v1049, %v1065
        %v1082 = vmul.f32 %v1050, %v1066
        %v1083 = vmul.f32 %v1051, %v1067
        %v1084 = vmul.f32 %v1052, %v1068
        %v1085 = vsub.f32 2.0, %v1069
        %v1086 = vsub.f32 2.0, %v1070
        %v1087 = vsub.f32 2.0, %v1071
        %v1088 = vsub.f32 2.0, %v1072
        %v1089 = vsub.f32 2.0, %v1073
        %v1090 = vsub.f32 2.0, %v1074
        %v1091 = vsub.f32 2.0, %v1075
        %v1092 = vsub.f32 2.0, %v1076
        %v1093 = vsub.f32 2.0, %v1077
        %v1094 = vsub.f32 2.0, %v1078
        %v1095 = vsub.f32 2.0, %v1079
        %v1096 = vsub.f32 2.0, %v1080
        %v1097 = vsub.f32 2.0, %v1081
        %v1098 = vsub.f32 2.0, %v1082
        %v1099 = vsub.f32 2.0, %v1083
        %v1100 = vsub.f32 2.0, %v1084
        %v1101 = vmul.f32 %v1053, %v1085
        %v1102 = vmul.f32 %v1054, %v1086
        %v1103 = vmul.f32 %v1055, %v1087
        %v1104 = vmul.f32 %v1056, %v1088
        %v1105 = vmul.f32 %v1057, %v1089
        %v1106 = vmul.f32 %v1058, %v1090
        %v1107 = vmul.f32 %v1059, %v1091
        %v1108 = vmul.f32 %v1060, %v1092
        %v1109 = vmul.f32 %v1061, %v1093
        %v1110 = vmul.f32 %v1062, %v1094
        %v1111 = vmul.f32 %v1063, %v1095
        %v1112 = vmul.f32 %v1064, %v1096
        %v1113 = vmul.f32 %v1065, %v1097
        %v1114 = vmul.f32 %v1066, %v1098
        %v1115 = vmul.f32 %v1067, %v1099
        %v1116 = vmul.f32 %v1068, %v1100
        %v1117 = vmul.f32 %v1101, %v989
        %v1118 = vmul.f32 %v1102, %v990
        %v1119 = vmul.f32 %v1103, %v991
        %v1120 = vmul.f32 %v1104, %v992
        %v1121 = vmul.f32 %v1105, %v993
        %v1122 = vmul.f32 %v1106, %v994
        %v1123 = vmul.f32 %v1107, %v995
        %v1124 = vmul.f32 %v1108, %v996
        %v1125 = vmul.f32 %v1109, %v997
        %v1126 = vmul.f32 %v1110, %v998
        %v1127 = vmul.f32 %v1111, %v999
        %v1128 = vmul.f32 %v1112, %v1000
        %v1129 = vmul.f32 %v1113, %v1001
        %v1130 = vmul.f32 %v1114, %v1002
        %v1131 = vmul.f32 %v1115, %v1003
        %v1132 = vmul.f32 %v1116, %v1004
        %v1133 = vsub.f32 %v1005, %v637
        %v1134 = vsub.f32 %v1006, %v638
        %v1135 = vsub.f32 %v1007, %v639
        %v1136 = vsub.f32 %v1008, %v640
        %v1137 = vsub.f32 %v1009, %v641
        %v1138 = vsub.f32 %v1010, %v642
        %v1139 = vsub.f32 %v1011, %v643
        %v1140 = vsub.f32 %v1012, %v644
        %v1141 = vsub.f32 %v1013, %v645
        %v1142 = vsub.f32 %v1014, %v646
        %v1143 = vsub.f32 %v1015, %v647
        %v1144 = vsub.f32 %v1016, %v648
        %v1145 = vsub.f32 %v1017, %v649
        %v1146 = vsub.f32 %v1018, %v650
        %v1147 = vsub.f32 %v1019, %v651
        %v1148 = vsub.f32 %v1020, %v652
        %v1149 = vand.u32 2147483647, %v1133
        %v1150 = vand.u32 2147483647, %v1134
        %v1151 = vand.u32 2147483647, %v1135
        %v1152 = vand.u32 2147483647, %v1136
        %v1153 = vand.u32 2147483647, %v1137
        %v1154 = vand.u32 2147483647, %v1138
        %v1155 = vand.u32 2147483647, %v1139
        %v1156 = vand.u32 2147483647, %v1140
        %v1157 = vand.u32 2147483647, %v1141
        %v1158 = vand.u32 2147483647, %v1142
        %v1159 = vand.u32 2147483647, %v1143
        %v1160 = vand.u32 2147483647, %v1144
        %v1161 = vand.u32 2147483647, %v1145
        %v1162 = vand.u32 2147483647, %v1146
        %v1163 = vand.u32 2147483647, %v1147
        %v1164 = vand.u32 2147483647, %v1148
        %v1165 = vmul.f32 %v1149, %v1117
        %v1166 = vmul.f32 %v1150, %v1118
        %v1167 = vmul.f32 %v1151, %v1119
        %v1168 = vmul.f32 %v1152, %v1120
        %v1169 = vmul.f32 %v1153, %v1121
        %v1170 = vmul.f32 %v1154, %v1122
        %v1171 = vmul.f32 %v1155, %v1123
        %v1172 = vmul.f32 %v1156, %v1124
        %v1173 = vmul.f32 %v1157, %v1125
        %v1174 = vmul.f32 %v1158, %v1126
        %v1175 = vmul.f32 %v1159, %v1127
        %v1176 = vmul.f32 %v1160, %v1128
        %v1177 = vmul.f32 %v1161, %v1129
        %v1178 = vmul.f32 %v1162, %v1130
        %v1179 = vmul.f32 %v1163, %v1131
        %v1180 = vmul.f32 %v1164, %v1132
        %vm1181 = vcmask 588800
        %v1182 = vsel %vm1181, %v1166, 0.0
        %v1183 = vadd.f32 %v1165, %v1182
        %v1184 = vadd.f32 %v1183, %v1167
        %v1185 = vsel %vm1181, %v1168, 0.0
        %v1186 = vadd.f32 %v1184, %v1185
        %v1187 = vadd.f32 %v1186, %v1169
        %v1188 = vsel %vm1181, %v1170, 0.0
        %v1189 = vadd.f32 %v1187, %v1188
        %v1190 = vadd.f32 %v1189, %v1171
        %v1191 = vsel %vm1181, %v1172, 0.0
        %v1192 = vadd.f32 %v1190, %v1191
        %v1193 = vadd.f32 %v1192, %v1173
        %v1194 = vsel %vm1181, %v1174, 0.0
        %v1195 = vadd.f32 %v1193, %v1194
        %v1196 = vadd.f32 %v1195, %v1175
        %v1197 = vsel %vm1181, %v1176, 0.0
        %v1198 = vadd.f32 %v1196, %v1197
        %v1199 = vadd.f32 %v1198, %v1177
        %v1200 = vsel %vm1181, %v1178, 0.0
        %v1201 = vadd.f32 %v1199, %v1200
        %v1202 = vadd.f32 %v1201, %v1179
        %v1203 = vsel %vm1181, %v1180, 0.0
        %v1204 = vadd.f32 %v1202, %v1203
        %1205 = vadd.xlane.f32.xlu0 %v1204
        %v1206 = vpop.xlane.xlu0 %1205
        %v1207 = vrot.slane %v1206, 4
        %v1208 = vadd.f32 %v1206, %v1207
        %v1209 = vrot.slane %v1208, 2
        %v1210 = vadd.f32 %v1208, %v1209
        %v1211 = vrot.slane %v1210, 1
        %v1212 = vadd.f32 %v1210, %v1211
        %s1213 = vtos %v1212
        %v1214 = vmul.f32 %v1165, %v1149
        %v1215 = vmul.f32 %v1166, %v1150
        %v1216 = vmul.f32 %v1167, %v1151
        %v1217 = vmul.f32 %v1168, %v1152
        %v1218 = vmul.f32 %v1169, %v1153
        %v1219 = vmul.f32 %v1170, %v1154
        %v1220 = vmul.f32 %v1171, %v1155
        %v1221 = vmul.f32 %v1172, %v1156
        %v1222 = vmul.f32 %v1173, %v1157
        %v1223 = vmul.f32 %v1174, %v1158
        %v1224 = vmul.f32 %v1175, %v1159
        %v1225 = vmul.f32 %v1176, %v1160
        %v1226 = vmul.f32 %v1177, %v1161
        %v1227 = vmul.f32 %v1178, %v1162
        %v1228 = vmul.f32 %v1179, %v1163
        %v1229 = vmul.f32 %v1180, %v1164
        %v1230 = vsel %vm1181, %v1215, 0.0
        %v1231 = vadd.f32 %v1214, %v1230
        %v1232 = vadd.f32 %v1231, %v1216
        %v1233 = vsel %vm1181, %v1217, 0.0
        %v1234 = vadd.f32 %v1232, %v1233
        %v1235 = vadd.f32 %v1234, %v1218
        %v1236 = vsel %vm1181, %v1219, 0.0
        %v1237 = vadd.f32 %v1235, %v1236
        %v1238 = vadd.f32 %v1237, %v1220
        %v1239 = vsel %vm1181, %v1221, 0.0
        %v1240 = vadd.f32 %v1238, %v1239
        %v1241 = vadd.f32 %v1240, %v1222
        %v1242 = vsel %vm1181, %v1223, 0.0
        %v1243 = vadd.f32 %v1241, %v1242
        %v1244 = vadd.f32 %v1243, %v1224
        %v1245 = vsel %vm1181, %v1225, 0.0
        %v1246 = vadd.f32 %v1244, %v1245
        %v1247 = vadd.f32 %v1246, %v1226
        %v1248 = vsel %vm1181, %v1227, 0.0
        %v1249 = vadd.f32 %v1247, %v1248
        %v1250 = vadd.f32 %v1249, %v1228
        %v1251 = vsel %vm1181, %v1229, 0.0
        %v1252 = vadd.f32 %v1250, %v1251
        %1253 = vadd.xlane.f32.xlu0 %v1252
        %v1254 = vpop.xlane.xlu0 %1253
        %v1255 = vrot.slane %v1254, 4
        %v1256 = vadd.f32 %v1254, %v1255
        %v1257 = vrot.slane %v1256, 2
        %v1258 = vadd.f32 %v1256, %v1257
        %v1259 = vrot.slane %v1258, 1
        %v1260 = vadd.f32 %v1258, %v1259
        %s1261 = vtos %v1260
        %v1262 = vsel %vm1181, %v990, 0.0
        %v1263 = vadd.f32 %v989, %v1262
        %v1264 = vadd.f32 %v1263, %v991
        %v1265 = vsel %vm1181, %v992, 0.0
        %v1266 = vadd.f32 %v1264, %v1265
        %v1267 = vadd.f32 %v1266, %v993
        %v1268 = vsel %vm1181, %v994, 0.0
        %v1269 = vadd.f32 %v1267, %v1268
        %v1270 = vadd.f32 %v1269, %v995
        %v1271 = vsel %vm1181, %v996, 0.0
        %v1272 = vadd.f32 %v1270, %v1271
        %v1273 = vadd.f32 %v1272, %v997
        %v1274 = vsel %vm1181, %v998, 0.0
        %v1275 = vadd.f32 %v1273, %v1274
        %v1276 = vadd.f32 %v1275, %v999
        %v1277 = vsel %vm1181, %v1000, 0.0
        %v1278 = vadd.f32 %v1276, %v1277
        %v1279 = vadd.f32 %v1278, %v1001
        %v1280 = vsel %vm1181, %v1002, 0.0
        %v1281 = vadd.f32 %v1279, %v1280
        %v1282 = vadd.f32 %v1281, %v1003
        %v1283 = vsel %vm1181, %v1004, 0.0
        %v1284 = vadd.f32 %v1282, %v1283
        %1285 = vadd.xlane.f32.xlu0 %v1284
        %v1286 = vpop.xlane.xlu0 %1285
        %v1287 = vrot.slane %v1286, 4
        %v1288 = vadd.f32 %v1286, %v1287
        %v1289 = vrot.slane %v1288, 2
        %v1290 = vadd.f32 %v1288, %v1289
        %v1291 = vrot.slane %v1290, 1
        %v1292 = vadd.f32 %v1290, %v1291
        %s1293 = vtos %v1292
        %v1294 = vstv %s1213
        %1295 = vst [vmem:[%s446] sm:$0x1] %v1294
        %v1296 = vstv %s1261
        %1297 = vst [vmem:[%s452] sm:$0x1] %v1296
        %v1298 = vstv %s1293
        %1299 = vst [vmem:[%s458] sm:$0x1] %v1298
        %s1300 = sand.u32 %s165, 1
        %s1301 = sand.u32 %s165, 1
        %s1302 = smul.addr %s1301, 64
        %s1303 = scalar_lea.vmem [#allocation4], %s1302
        %s1304 = sand.u32 %s193, 1
        %s1305 = sand.u32 %s193, 1
        %s1306 = smul.addr %s1305, 64
        %s1307 = scalar_lea.vmem [#allocation5], %s1306
        %s1308 = sand.u32 %s221, 1
        %s1309 = scalar_lea.sflag [#allocation7], %s1308
        %s1310 = sand.u32 %s221, 1
        %s1311 = scalar_lea.vmem [#allocation6], %s1310
        %s1312 = sand.u32 %s35, 1
        %s1313 = scalar_lea.sflag [#allocation9], %s1312
        %s1314 = sand.u32 %s249, 1
        %s1315 = scalar_lea.vmem [#allocation8], %s1314
        %s1316 = sand.u32 %s35, 1
        %s1317 = scalar_lea.sflag [#allocation9], %s1316
        %s1318 = sand.u32 %s277, 1
        %s1319 = scalar_lea.vmem [#allocation10], %s1318
        // Predicated region
        $region37: #{tpu_custom_call.1} parent=35 // pred_check
          %p1320 = pneg %p175
        $region38: #{tpu_custom_call.1} parent=35 // pred_check_branch
          %1322 = sbr.rel (%p1320) target = $region40
        $region39: #{tpu_custom_call.1} parent=35 // pred_region
          %s1323 = smul.u32 8, %s40
          %s1324 = ssub.s32 13, %s1323
          %p1325 = scmp.lt.s32.totalorder %s1324, 8
          %s1326 = scalar_select %p1325, %s1324, 8
          %s1327 = smul.u32 4, %s1326
          %s1328 = smul.u32 %s1327, 2
          %p1329 = scmp.ne.s32.totalorder 0, %s1328
          %s1330 = smul.addr %s1323, 2
          %s1331 = smul.addr %s39, 26
          %s1332 = sadd.s32 %s1330, %s1331
          %s1333 = smul.addr %s1332, 4
          %s1334 = scalar_lea.vmem %s5, %s1333
          // Predicated region
          $region41: #{tpu_custom_call.1} parent=39 // pred_check
            %p1335 = pneg %p1329
          $region42: #{tpu_custom_call.1} parent=39 // pred_check_branch
            %1337 = sbr.rel (%p1335) target = $region44
          $region43: #{tpu_custom_call.1} parent=39 // pred_region
            // Predicated region
            $region45: #{tpu_custom_call.1} parent=43 // pred_check
              _
            $region46: #{tpu_custom_call.1} parent=43 // pred_check_branch
              %1339 = sbr.rel (0) target = $region48
            $region47: #{tpu_custom_call.1} parent=43 // pred_region
              // Predicated region
              $region67: #{tpu_custom_call.1} parent=47 // pred_check
                _
              $region68: #{tpu_custom_call.1} parent=47 // pred_check_branch
                %1403 = sbr.rel (0) target = $region70
              $region69: #{tpu_custom_call.1} parent=47 // pred_region
                %s1404 = sshrl.u32 %s1326, 3
                // While loop
                $region71: #{tpu_custom_call.1} parent=69 // loop_pre_header
                  _
                $region72: #{tpu_custom_call.1} parent=69 // loop_header
                  %s1406 = sphi 0, %s1408
                  %p1407 = scmp.ge.s32.totalorder %s1406, %s1404
                  %s1411 = sphi 0, %s1432
                  %s1412 = sphi %s1303, %s1435
                  %s1413 = sphi %s1334, %s1436
                $region73: #{tpu_custom_call.1} parent=69 // loop_header_branch
                  %1410 = sbr.rel (%p1407) target = $region77
                $region74: #{tpu_custom_call.1} parent=69 // loop_body
                  %v1414 = vld [vmem:[%s1412] sm:$0xff]
                  %1415 = vst [vmem:[%s1413] sm:$0xff] %v1414
                  %v1416 = vld [vmem:[%s1412 + $0x8] sm:$0xff]
                  %1417 = vst [vmem:[%s1413 + $0x8] sm:$0xff] %v1416
                  %v1418 = vld [vmem:[%s1412 + $0x10] sm:$0xff]
                  %1419 = vst [vmem:[%s1413 + $0x10] sm:$0xff] %v1418
                  %v1420 = vld [vmem:[%s1412 + $0x18] sm:$0xff]
                  %1421 = vst [vmem:[%s1413 + $0x18] sm:$0xff] %v1420
                  %v1422 = vld [vmem:[%s1412 + $0x20] sm:$0xff]
                  %1423 = vst [vmem:[%s1413 + $0x20] sm:$0xff] %v1422
                  %v1424 = vld [vmem:[%s1412 + $0x28] sm:$0xff]
                  %1425 = vst [vmem:[%s1413 + $0x28] sm:$0xff] %v1424
                  %v1426 = vld [vmem:[%s1412 + $0x30] sm:$0xff]
                  %1427 = vst [vmem:[%s1413 + $0x30] sm:$0xff] %v1426
                  %v1428 = vld [vmem:[%s1412 + $0x38] sm:$0xff]
                  %1429 = vst [vmem:[%s1413 + $0x38] sm:$0xff] %v1428
                  %s1430 = sadd.s32 1, %s1411
                  %p1431 = scmp.ge.s32.totalorder %s1430, %s1404
                  %s1432 = scalar_select %p1431, 0, %s1430
                  %s1433 = smul.u32 %s1432, 64
                  %s1434 = smul.u32 %s1432, 64
                  %s1435 = scalar_lea.vmem %s1303, %s1433 [#allocation4]
                  %s1436 = scalar_lea.vmem %s1334, %s1434
                $region75: #{tpu_custom_call.1} parent=69 // loop_footer
                  %s1408 = sadd.s32 %s1406, 1
                $region76: #{tpu_custom_call.1} parent=69 // loop_footer_branch
                  %1405 = sbr.rel target = $region72
                $region77: #{tpu_custom_call.1} parent=69 // loop_exit
                  _
                %s1437 = sshrl.u32 %s1326, 3
                %s1438 = sand.u32 %s1326, 7
                %s1439 = smul.u32 %s1437, 8
                %s1440 = smul.u32 8, %s1439
                %s1441 = scalar_lea.vmem %s1303, %s1440 [#allocation4]
                %s1442 = smul.u32 8, %s1439
                %s1443 = scalar_lea.vmem %s1334, %s1442
                // While loop
                $region78: #{tpu_custom_call.1} parent=69 // loop_pre_header
                  _
                $region79: #{tpu_custom_call.1} parent=69 // loop_header
                  %s1445 = sphi 0, %s1447
                  %p1446 = scmp.ge.s32.totalorder %s1445, %s1438
                  %s1450 = sphi 0, %s1457
                  %s1451 = sphi %s1441, %s1460
                  %s1452 = sphi %s1443, %s1461
                $region80: #{tpu_custom_call.1} parent=69 // loop_header_branch
                  %1449 = sbr.rel (%p1446) target = $region84
                $region81: #{tpu_custom_call.1} parent=69 // loop_body
                  %v1453 = vld [vmem:[%s1451] sm:$0xff]
                  %1454 = vst [vmem:[%s1452] sm:$0xff] %v1453
                  %s1455 = sadd.s32 1, %s1450
                  %p1456 = scmp.ge.s32.totalorder %s1455, %s1438
                  %s1457 = scalar_select %p1456, 0, %s1455
                  %s1458 = smul.u32 %s1457, 8
                  %s1459 = smul.u32 %s1457, 8
                  %s1460 = scalar_lea.vmem %s1441, %s1458 [#allocation4]
                  %s1461 = scalar_lea.vmem %s1443, %s1459
                $region82: #{tpu_custom_call.1} parent=69 // loop_footer
                  %s1447 = sadd.s32 %s1445, 1
                $region83: #{tpu_custom_call.1} parent=69 // loop_footer_branch
                  %1444 = sbr.rel target = $region79
                $region84: #{tpu_custom_call.1} parent=69 // loop_exit
                  _
              $region70: #{tpu_custom_call.1} parent=47 // pred_fallthru
                _
              // Predicated region
              $region85: #{tpu_custom_call.1} parent=47 // pred_check
                _
              $region86: #{tpu_custom_call.1} parent=47 // pred_check_branch
                %1463 = sbr.rel target = $region88
              $region87: #{tpu_custom_call.1} parent=47 // pred_region
                _
              $region88: #{tpu_custom_call.1} parent=47 // pred_fallthru
                _
            $region48: #{tpu_custom_call.1} parent=43 // pred_fallthru
              _
            // Predicated region
            $region49: #{tpu_custom_call.1} parent=43 // pred_check
              _
            $region50: #{tpu_custom_call.1} parent=43 // pred_check_branch
              %1341 = sbr.rel target = $region52
            $region51: #{tpu_custom_call.1} parent=43 // pred_region
              %s1343 = ssub.s32 256, 1
              %s1344 = sshrl.u32 %s1326, 3
              // While loop
              $region53: #{tpu_custom_call.1} parent=51 // loop_pre_header
                _
              $region54: #{tpu_custom_call.1} parent=51 // loop_header
                %s1346 = sphi 0, %s1348
                %p1347 = scmp.ge.s32.totalorder %s1346, %s1344
                %s1351 = sphi 0, %s1372
                %s1352 = sphi %s1303, %s1375
                %s1353 = sphi %s1334, %s1376
              $region55: #{tpu_custom_call.1} parent=51 // loop_header_branch
                %1350 = sbr.rel (%p1347) target = $region59
              $region56: #{tpu_custom_call.1} parent=51 // loop_body
                %v1354 = vld [vmem:[%s1352] sm:%s1343]
                %1355 = vst [vmem:[%s1353] sm:%s1343] %v1354
                %v1356 = vld [vmem:[%s1352 + $0x8] sm:%s1343]
                %1357 = vst [vmem:[%s1353 + $0x8] sm:%s1343] %v1356
                %v1358 = vld [vmem:[%s1352 + $0x10] sm:%s1343]
                %1359 = vst [vmem:[%s1353 + $0x10] sm:%s1343] %v1358
                %v1360 = vld [vmem:[%s1352 + $0x18] sm:%s1343]
                %1361 = vst [vmem:[%s1353 + $0x18] sm:%s1343] %v1360
                %v1362 = vld [vmem:[%s1352 + $0x20] sm:%s1343]
                %1363 = vst [vmem:[%s1353 + $0x20] sm:%s1343] %v1362
                %v1364 = vld [vmem:[%s1352 + $0x28] sm:%s1343]
                %1365 = vst [vmem:[%s1353 + $0x28] sm:%s1343] %v1364
                %v1366 = vld [vmem:[%s1352 + $0x30] sm:%s1343]
                %1367 = vst [vmem:[%s1353 + $0x30] sm:%s1343] %v1366
                %v1368 = vld [vmem:[%s1352 + $0x38] sm:%s1343]
                %1369 = vst [vmem:[%s1353 + $0x38] sm:%s1343] %v1368
                %s1370 = sadd.s32 1, %s1351
                %p1371 = scmp.ge.s32.totalorder %s1370, %s1344
                %s1372 = scalar_select %p1371, 0, %s1370
                %s1373 = smul.u32 %s1372, 64
                %s1374 = smul.u32 %s1372, 64
                %s1375 = scalar_lea.vmem %s1303, %s1373 [#allocation4]
                %s1376 = scalar_lea.vmem %s1334, %s1374
              $region57: #{tpu_custom_call.1} parent=51 // loop_footer
                %s1348 = sadd.s32 %s1346, 1
              $region58: #{tpu_custom_call.1} parent=51 // loop_footer_branch
                %1345 = sbr.rel target = $region54
              $region59: #{tpu_custom_call.1} parent=51 // loop_exit
                _
              %s1377 = sshrl.u32 %s1326, 3
              %s1378 = sand.u32 %s1326, 7
              %s1379 = smul.u32 %s1377, 8
              %s1380 = smul.u32 8, %s1379
              %s1381 = scalar_lea.vmem %s1303, %s1380 [#allocation4]
              %s1382 = smul.u32 8, %s1379
              %s1383 = scalar_lea.vmem %s1334, %s1382
              // While loop
              $region60: #{tpu_custom_call.1} parent=51 // loop_pre_header
                _
              $region61: #{tpu_custom_call.1} parent=51 // loop_header
                %s1385 = sphi 0, %s1387
                %p1386 = scmp.ge.s32.totalorder %s1385, %s1378
                %s1390 = sphi 0, %s1397
                %s1391 = sphi %s1381, %s1400
                %s1392 = sphi %s1383, %s1401
              $region62: #{tpu_custom_call.1} parent=51 // loop_header_branch
                %1389 = sbr.rel (%p1386) target = $region66
              $region63: #{tpu_custom_call.1} parent=51 // loop_body
                %v1393 = vld [vmem:[%s1391] sm:%s1343]
                %1394 = vst [vmem:[%s1392] sm:%s1343] %v1393
                %s1395 = sadd.s32 1, %s1390
                %p1396 = scmp.ge.s32.totalorder %s1395, %s1378
                %s1397 = scalar_select %p1396, 0, %s1395
                %s1398 = smul.u32 %s1397, 8
                %s1399 = smul.u32 %s1397, 8
                %s1400 = scalar_lea.vmem %s1381, %s1398 [#allocation4]
                %s1401 = scalar_lea.vmem %s1383, %s1399
              $region64: #{tpu_custom_call.1} parent=51 // loop_footer
                %s1387 = sadd.s32 %s1385, 1
              $region65: #{tpu_custom_call.1} parent=51 // loop_footer_branch
                %1384 = sbr.rel target = $region61
              $region66: #{tpu_custom_call.1} parent=51 // loop_exit
                _
            $region52: #{tpu_custom_call.1} parent=43 // pred_fallthru
              _
          $region44: #{tpu_custom_call.1} parent=39 // pred_fallthru
            _
          %1464 = vnop
        $region40: #{tpu_custom_call.1} parent=35 // pred_fallthru
          _
        // Predicated region
        $region89: #{tpu_custom_call.1} parent=35 // pred_check
          %p1465 = pneg %p203
        $region90: #{tpu_custom_call.1} parent=35 // pred_check_branch
          %1467 = sbr.rel (%p1465) target = $region92
        $region91: #{tpu_custom_call.1} parent=35 // pred_region
          %s1468 = smul.u32 8, %s40
          %s1469 = ssub.s32 13, %s1468
          %p1470 = scmp.lt.s32.totalorder %s1469, 8
          %s1471 = scalar_select %p1470, %s1469, 8
          %s1472 = smul.u32 4, %s1471
          %s1473 = smul.u32 %s1472, 2
          %p1474 = scmp.ne.s32.totalorder 0, %s1473
          %s1475 = smul.addr %s1468, 2
          %s1476 = smul.addr %s39, 26
          %s1477 = sadd.s32 %s1475, %s1476
          %s1478 = smul.addr %s1477, 4
          %s1479 = scalar_lea.vmem %s6, %s1478
          // Predicated region
          $region93: #{tpu_custom_call.1} parent=91 // pred_check
            %p1480 = pneg %p1474
          $region94: #{tpu_custom_call.1} parent=91 // pred_check_branch
            %1482 = sbr.rel (%p1480) target = $region96
          $region95: #{tpu_custom_call.1} parent=91 // pred_region
            // Predicated region
            $region97: #{tpu_custom_call.1} parent=95 // pred_check
              _
            $region98: #{tpu_custom_call.1} parent=95 // pred_check_branch
              %1484 = sbr.rel (0) target = $region100
            $region99: #{tpu_custom_call.1} parent=95 // pred_region
              // Predicated region
              $region119: #{tpu_custom_call.1} parent=99 // pred_check
                _
              $region120: #{tpu_custom_call.1} parent=99 // pred_check_branch
                %1548 = sbr.rel (0) target = $region122
              $region121: #{tpu_custom_call.1} parent=99 // pred_region
                %s1549 = sshrl.u32 %s1471, 3
                // While loop
                $region123: #{tpu_custom_call.1} parent=121 // loop_pre_header
                  _
                $region124: #{tpu_custom_call.1} parent=121 // loop_header
                  %s1551 = sphi 0, %s1553
                  %p1552 = scmp.ge.s32.totalorder %s1551, %s1549
                  %s1556 = sphi 0, %s1577
                  %s1557 = sphi %s1307, %s1580
                  %s1558 = sphi %s1479, %s1581
                $region125: #{tpu_custom_call.1} parent=121 // loop_header_branch
                  %1555 = sbr.rel (%p1552) target = $region129
                $region126: #{tpu_custom_call.1} parent=121 // loop_body
                  %v1559 = vld [vmem:[%s1557] sm:$0xff]
                  %1560 = vst [vmem:[%s1558] sm:$0xff] %v1559
                  %v1561 = vld [vmem:[%s1557 + $0x8] sm:$0xff]
                  %1562 = vst [vmem:[%s1558 + $0x8] sm:$0xff] %v1561
                  %v1563 = vld [vmem:[%s1557 + $0x10] sm:$0xff]
                  %1564 = vst [vmem:[%s1558 + $0x10] sm:$0xff] %v1563
                  %v1565 = vld [vmem:[%s1557 + $0x18] sm:$0xff]
                  %1566 = vst [vmem:[%s1558 + $0x18] sm:$0xff] %v1565
                  %v1567 = vld [vmem:[%s1557 + $0x20] sm:$0xff]
                  %1568 = vst [vmem:[%s1558 + $0x20] sm:$0xff] %v1567
                  %v1569 = vld [vmem:[%s1557 + $0x28] sm:$0xff]
                  %1570 = vst [vmem:[%s1558 + $0x28] sm:$0xff] %v1569
                  %v1571 = vld [vmem:[%s1557 + $0x30] sm:$0xff]
                  %1572 = vst [vmem:[%s1558 + $0x30] sm:$0xff] %v1571
                  %v1573 = vld [vmem:[%s1557 + $0x38] sm:$0xff]
                  %1574 = vst [vmem:[%s1558 + $0x38] sm:$0xff] %v1573
                  %s1575 = sadd.s32 1, %s1556
                  %p1576 = scmp.ge.s32.totalorder %s1575, %s1549
                  %s1577 = scalar_select %p1576, 0, %s1575
                  %s1578 = smul.u32 %s1577, 64
                  %s1579 = smul.u32 %s1577, 64
                  %s1580 = scalar_lea.vmem %s1307, %s1578 [#allocation5]
                  %s1581 = scalar_lea.vmem %s1479, %s1579
                $region127: #{tpu_custom_call.1} parent=121 // loop_footer
                  %s1553 = sadd.s32 %s1551, 1
                $region128: #{tpu_custom_call.1} parent=121 // loop_footer_branch
                  %1550 = sbr.rel target = $region124
                $region129: #{tpu_custom_call.1} parent=121 // loop_exit
                  _
                %s1582 = sshrl.u32 %s1471, 3
                %s1583 = sand.u32 %s1471, 7
                %s1584 = smul.u32 %s1582, 8
                %s1585 = smul.u32 8, %s1584
                %s1586 = scalar_lea.vmem %s1307, %s1585 [#allocation5]
                %s1587 = smul.u32 8, %s1584
                %s1588 = scalar_lea.vmem %s1479, %s1587
                // While loop
                $region130: #{tpu_custom_call.1} parent=121 // loop_pre_header
                  _
                $region131: #{tpu_custom_call.1} parent=121 // loop_header
                  %s1590 = sphi 0, %s1592
                  %p1591 = scmp.ge.s32.totalorder %s1590, %s1583
                  %s1595 = sphi 0, %s1602
                  %s1596 = sphi %s1586, %s1605
                  %s1597 = sphi %s1588, %s1606
                $region132: #{tpu_custom_call.1} parent=121 // loop_header_branch
                  %1594 = sbr.rel (%p1591) target = $region136
                $region133: #{tpu_custom_call.1} parent=121 // loop_body
                  %v1598 = vld [vmem:[%s1596] sm:$0xff]
                  %1599 = vst [vmem:[%s1597] sm:$0xff] %v1598
                  %s1600 = sadd.s32 1, %s1595
                  %p1601 = scmp.ge.s32.totalorder %s1600, %s1583
                  %s1602 = scalar_select %p1601, 0, %s1600
                  %s1603 = smul.u32 %s1602, 8
                  %s1604 = smul.u32 %s1602, 8
                  %s1605 = scalar_lea.vmem %s1586, %s1603 [#allocation5]
                  %s1606 = scalar_lea.vmem %s1588, %s1604
                $region134: #{tpu_custom_call.1} parent=121 // loop_footer
                  %s1592 = sadd.s32 %s1590, 1
                $region135: #{tpu_custom_call.1} parent=121 // loop_footer_branch
                  %1589 = sbr.rel target = $region131
                $region136: #{tpu_custom_call.1} parent=121 // loop_exit
                  _
              $region122: #{tpu_custom_call.1} parent=99 // pred_fallthru
                _
              // Predicated region
              $region137: #{tpu_custom_call.1} parent=99 // pred_check
                _
              $region138: #{tpu_custom_call.1} parent=99 // pred_check_branch
                %1608 = sbr.rel target = $region140
              $region139: #{tpu_custom_call.1} parent=99 // pred_region
                _
              $region140: #{tpu_custom_call.1} parent=99 // pred_fallthru
                _
            $region100: #{tpu_custom_call.1} parent=95 // pred_fallthru
              _
            // Predicated region
            $region101: #{tpu_custom_call.1} parent=95 // pred_check
              _
            $region102: #{tpu_custom_call.1} parent=95 // pred_check_branch
              %1486 = sbr.rel target = $region104
            $region103: #{tpu_custom_call.1} parent=95 // pred_region
              %s1488 = ssub.s32 256, 1
              %s1489 = sshrl.u32 %s1471, 3
              // While loop
              $region105: #{tpu_custom_call.1} parent=103 // loop_pre_header
                _
              $region106: #{tpu_custom_call.1} parent=103 // loop_header
                %s1491 = sphi 0, %s1493
                %p1492 = scmp.ge.s32.totalorder %s1491, %s1489
                %s1496 = sphi 0, %s1517
                %s1497 = sphi %s1307, %s1520
                %s1498 = sphi %s1479, %s1521
              $region107: #{tpu_custom_call.1} parent=103 // loop_header_branch
                %1495 = sbr.rel (%p1492) target = $region111
              $region108: #{tpu_custom_call.1} parent=103 // loop_body
                %v1499 = vld [vmem:[%s1497] sm:%s1488]
                %1500 = vst [vmem:[%s1498] sm:%s1488] %v1499
                %v1501 = vld [vmem:[%s1497 + $0x8] sm:%s1488]
                %1502 = vst [vmem:[%s1498 + $0x8] sm:%s1488] %v1501
                %v1503 = vld [vmem:[%s1497 + $0x10] sm:%s1488]
                %1504 = vst [vmem:[%s1498 + $0x10] sm:%s1488] %v1503
                %v1505 = vld [vmem:[%s1497 + $0x18] sm:%s1488]
                %1506 = vst [vmem:[%s1498 + $0x18] sm:%s1488] %v1505
                %v1507 = vld [vmem:[%s1497 + $0x20] sm:%s1488]
                %1508 = vst [vmem:[%s1498 + $0x20] sm:%s1488] %v1507
                %v1509 = vld [vmem:[%s1497 + $0x28] sm:%s1488]
                %1510 = vst [vmem:[%s1498 + $0x28] sm:%s1488] %v1509
                %v1511 = vld [vmem:[%s1497 + $0x30] sm:%s1488]
                %1512 = vst [vmem:[%s1498 + $0x30] sm:%s1488] %v1511
                %v1513 = vld [vmem:[%s1497 + $0x38] sm:%s1488]
                %1514 = vst [vmem:[%s1498 + $0x38] sm:%s1488] %v1513
                %s1515 = sadd.s32 1, %s1496
                %p1516 = scmp.ge.s32.totalorder %s1515, %s1489
                %s1517 = scalar_select %p1516, 0, %s1515
                %s1518 = smul.u32 %s1517, 64
                %s1519 = smul.u32 %s1517, 64
                %s1520 = scalar_lea.vmem %s1307, %s1518 [#allocation5]
                %s1521 = scalar_lea.vmem %s1479, %s1519
              $region109: #{tpu_custom_call.1} parent=103 // loop_footer
                %s1493 = sadd.s32 %s1491, 1
              $region110: #{tpu_custom_call.1} parent=103 // loop_footer_branch
                %1490 = sbr.rel target = $region106
              $region111: #{tpu_custom_call.1} parent=103 // loop_exit
                _
              %s1522 = sshrl.u32 %s1471, 3
              %s1523 = sand.u32 %s1471, 7
              %s1524 = smul.u32 %s1522, 8
              %s1525 = smul.u32 8, %s1524
              %s1526 = scalar_lea.vmem %s1307, %s1525 [#allocation5]
              %s1527 = smul.u32 8, %s1524
              %s1528 = scalar_lea.vmem %s1479, %s1527
              // While loop
              $region112: #{tpu_custom_call.1} parent=103 // loop_pre_header
                _
              $region113: #{tpu_custom_call.1} parent=103 // loop_header
                %s1530 = sphi 0, %s1532
                %p1531 = scmp.ge.s32.totalorder %s1530, %s1523
                %s1535 = sphi 0, %s1542
                %s1536 = sphi %s1526, %s1545
                %s1537 = sphi %s1528, %s1546
              $region114: #{tpu_custom_call.1} parent=103 // loop_header_branch
                %1534 = sbr.rel (%p1531) target = $region118
              $region115: #{tpu_custom_call.1} parent=103 // loop_body
                %v1538 = vld [vmem:[%s1536] sm:%s1488]
                %1539 = vst [vmem:[%s1537] sm:%s1488] %v1538
                %s1540 = sadd.s32 1, %s1535
                %p1541 = scmp.ge.s32.totalorder %s1540, %s1523
                %s1542 = scalar_select %p1541, 0, %s1540
                %s1543 = smul.u32 %s1542, 8
                %s1544 = smul.u32 %s1542, 8
                %s1545 = scalar_lea.vmem %s1526, %s1543 [#allocation5]
                %s1546 = scalar_lea.vmem %s1528, %s1544
              $region116: #{tpu_custom_call.1} parent=103 // loop_footer
                %s1532 = sadd.s32 %s1530, 1
              $region117: #{tpu_custom_call.1} parent=103 // loop_footer_branch
                %1529 = sbr.rel target = $region113
              $region118: #{tpu_custom_call.1} parent=103 // loop_exit
                _
            $region104: #{tpu_custom_call.1} parent=95 // pred_fallthru
              _
          $region96: #{tpu_custom_call.1} parent=91 // pred_fallthru
            _
          %1609 = vnop
        $region92: #{tpu_custom_call.1} parent=35 // pred_fallthru
          _
        // Predicated region
        $region141: #{tpu_custom_call.1} parent=35 // pred_check
          %p1610 = pneg %p231
        $region142: #{tpu_custom_call.1} parent=35 // pred_check_branch
          %1612 = sbr.rel (%p1610) target = $region144
        $region143: #{tpu_custom_call.1} parent=35 // pred_region
          %1614 = vsyncadd %s1309, 0
          %s1615 = smul.addr %s39, 2
          %s1616 = sadd.s32 %s40, %s1615
          %s1617 = scalar_lea.hbm %s7, %s1616
          %s1619 = sshll.u32 %s1311, 4
          %s1620 = int_to_ptr.vmem [resolvable:$true] %s1619
          %s1621 = sshll.u32 %s1617, 4
          %s1622 = int_to_ptr.hbm [resolvable:$true] %s1621
          %1624 = dma.vmem_to_hbm [thread:$0]  %s1620, 16, %s1622, %s1309
        $region144: #{tpu_custom_call.1} parent=35 // pred_fallthru
          _
        // Predicated region
        $region145: #{tpu_custom_call.1} parent=35 // pred_check
          %p1625 = pneg %p259
        $region146: #{tpu_custom_call.1} parent=35 // pred_check_branch
          %1627 = sbr.rel (%p1625) target = $region148
        $region147: #{tpu_custom_call.1} parent=35 // pred_region
          %1629 = vsyncadd %s1313, 0
          %s1630 = smul.addr %s39, 2
          %s1631 = sadd.s32 %s40, %s1630
          %s1632 = scalar_lea.hbm %s8, %s1631
          %s1634 = sshll.u32 %s1315, 4
          %s1635 = int_to_ptr.vmem [resolvable:$true] %s1634
          %s1636 = sshll.u32 %s1632, 4
          %s1637 = int_to_ptr.hbm [resolvable:$true] %s1636
          %1639 = dma.vmem_to_hbm [thread:$0]  %s1635, 16, %s1637, %s1313
        $region148: #{tpu_custom_call.1} parent=35 // pred_fallthru
          _
        // Predicated region
        $region149: #{tpu_custom_call.1} parent=35 // pred_check
          %p1640 = pneg %p287
        $region150: #{tpu_custom_call.1} parent=35 // pred_check_branch
          %1642 = sbr.rel (%p1640) target = $region152
        $region151: #{tpu_custom_call.1} parent=35 // pred_region
          %1644 = vsyncadd %s1317, 0
          %s1645 = smul.addr %s39, 2
          %s1646 = sadd.s32 %s40, %s1645
          %s1647 = scalar_lea.hbm %s9, %s1646
          %s1649 = sshll.u32 %s1319, 4
          %s1650 = int_to_ptr.vmem [resolvable:$true] %s1649
          %s1651 = sshll.u32 %s1647, 4
          %s1652 = int_to_ptr.hbm [resolvable:$true] %s1651
          %1654 = dma.vmem_to_hbm [thread:$0]  %s1650, 16, %s1652, %s1317
        $region152: #{tpu_custom_call.1} parent=35 // pred_fallthru
          _
      $region36: #{tpu_custom_call.1} parent=5 // pred_fallthru
        _
      %p1655 = scmp.le.s32.totalorder 2, %s30
      // Predicated region
      $region153: #{tpu_custom_call.1} parent=5 // pred_check
        %p1656 = pneg %p1655
      $region154: #{tpu_custom_call.1} parent=5 // pred_check_branch
        %1658 = sbr.rel (%p1656) target = $region156
      $region155: #{tpu_custom_call.1} parent=5 // pred_region
        %s1659 = ssub.s32 %s30, 2
        // Predicated region
        $region157: #{tpu_custom_call.1} parent=155 // pred_check
          %p1660 = pneg %p181
        $region158: #{tpu_custom_call.1} parent=155 // pred_check_branch
          %1662 = sbr.rel (%p1660) target = $region160
        $region159: #{tpu_custom_call.1} parent=155 // pred_region
          %s1663 = sand.u32 %s166, 1
          %s1664 = sand.u32 %s166, 1
          %s1665 = smul.addr %s1664, 64
          %s1666 = scalar_lea.vmem [#allocation4], %s1665
        $region160: #{tpu_custom_call.1} parent=155 // pred_fallthru
          _
        // Predicated region
        $region161: #{tpu_custom_call.1} parent=155 // pred_check
          %p1667 = pneg %p209
        $region162: #{tpu_custom_call.1} parent=155 // pred_check_branch
          %1669 = sbr.rel (%p1667) target = $region164
        $region163: #{tpu_custom_call.1} parent=155 // pred_region
          %s1670 = sand.u32 %s194, 1
          %s1671 = sand.u32 %s194, 1
          %s1672 = smul.addr %s1671, 64
          %s1673 = scalar_lea.vmem [#allocation5], %s1672
        $region164: #{tpu_custom_call.1} parent=155 // pred_fallthru
          _
        // Predicated region
        $region165: #{tpu_custom_call.1} parent=155 // pred_check
          %p1674 = pneg %p237
        $region166: #{tpu_custom_call.1} parent=155 // pred_check_branch
          %1676 = sbr.rel (%p1674) target = $region168
        $region167: #{tpu_custom_call.1} parent=155 // pred_region
          %s1677 = sand.u32 %s222, 1
          %s1678 = scalar_lea.sflag [#allocation7], %s1677
          %s1679 = sand.u32 %s222, 1
          %s1680 = scalar_lea.vmem [#allocation6], %s1679
          %1682 = dma.done %s1678, 16
        $region168: #{tpu_custom_call.1} parent=155 // pred_fallthru
          _
        // Predicated region
        $region169: #{tpu_custom_call.1} parent=155 // pred_check
          %p1683 = pneg %p265
        $region170: #{tpu_custom_call.1} parent=155 // pred_check_branch
          %1685 = sbr.rel (%p1683) target = $region172
        $region171: #{tpu_custom_call.1} parent=155 // pred_region
          %s1686 = sand.u32 %s36, 1
          %s1687 = scalar_lea.sflag [#allocation9], %s1686
          %s1688 = sand.u32 %s250, 1
          %s1689 = scalar_lea.vmem [#allocation8], %s1688
          %1691 = dma.done %s1687, 16
        $region172: #{tpu_custom_call.1} parent=155 // pred_fallthru
          _
        // Predicated region
        $region173: #{tpu_custom_call.1} parent=155 // pred_check
          %p1692 = pneg %p293
        $region174: #{tpu_custom_call.1} parent=155 // pred_check_branch
          %1694 = sbr.rel (%p1692) target = $region176
        $region175: #{tpu_custom_call.1} parent=155 // pred_region
          %s1695 = sand.u32 %s36, 1
          %s1696 = scalar_lea.sflag [#allocation9], %s1695
          %s1697 = sand.u32 %s278, 1
          %s1698 = scalar_lea.vmem [#allocation10], %s1697
          %1700 = dma.done %s1696, 16
        $region176: #{tpu_custom_call.1} parent=155 // pred_fallthru
          _
      $region156: #{tpu_custom_call.1} parent=5 // pred_fallthru
        _
    $region6: #{tpu_custom_call.1} parent=1 // loop_footer
      %s34 = sadd.s32 1, %s30
    $region7: #{tpu_custom_call.1} parent=1 // loop_footer_branch
      %29 = sbr.rel target = $region3
    $region8: #{tpu_custom_call.1} parent=1 // loop_exit
      _
    %1701 = vsyncpa [#allocation7], 1
    %s1702 = scalar_lea.sflag [#allocation7], 1
    %1703 = vsyncpa %s1702, 1
    %1704 = vsyncpa [#allocation9], 1
    %s1705 = scalar_lea.sflag [#allocation9], 1
    %1706 = vsyncpa %s1705, 1

</llo_original>
